<compile_context>
chip_gen: v7x
topology: tpu7x:2x2x1
jax: 0.10.0
libtpu: 0.0.40
codegen_flags: <defaults>
</compile_context>

<pallas_src>
import functools
import math

import jax
import jax.numpy as jnp
from jax import lax
from jax.experimental import pallas as pl
from jax.experimental.pallas import tpu as pltpu


def _self_attention_layer_kernel(tgt_ref, pos_ref, bias_ref,
                                 wq_ref, wk_ref, wv_ref, wo_ref,
                                 bq_ref, bk_ref, bv_ref, bo_ref,
                                 gamma_ref, beta_ref,
                                 out_ref, *, nhead, normalize_before, eps):
    """One batch element: tgt_ref (1,S,D) -> out_ref (1,S,D)."""
    x = tgt_ref[0]              # (S, D) original residual input
    pos = pos_ref[0]            # (S, D) positional embedding (zeros if None)
    bias = bias_ref[0]          # (S, S) additive attention bias (0 / -1e9)
    S, D = x.shape
    hd = D // nhead
    scale = 1.0 / math.sqrt(hd)

    gamma = gamma_ref[...]      # (1, D)
    beta = beta_ref[...]        # (1, D)

    def layer_norm(t):
        mu = jnp.mean(t, axis=-1, keepdims=True)
        tc = t - mu
        var = jnp.mean(tc * tc, axis=-1, keepdims=True)
        return tc * lax.rsqrt(var + eps) * gamma + beta

    xin = layer_norm(x) if normalize_before else x

    qk = xin + pos
    q = jnp.dot(qk, wq_ref[...], preferred_element_type=jnp.float32) + bq_ref[...]
    k = jnp.dot(qk, wk_ref[...], preferred_element_type=jnp.float32) + bk_ref[...]
    v = jnp.dot(xin, wv_ref[...], preferred_element_type=jnp.float32) + bv_ref[...]

    wo = wo_ref[...]            # (D, D); rows h*hd:(h+1)*hd belong to head h

    attn_out = jnp.zeros((S, D), jnp.float32)
    for h in range(nhead):      # static unroll; nhead is small
        sl = slice(h * hd, (h + 1) * hd)
        qh = q[:, sl]           # (S, hd)
        kh = k[:, sl]
        vh = v[:, sl]
        s = jnp.einsum('qd,kd->qk', qh, kh,
                       preferred_element_type=jnp.float32) * scale + bias
        s = s - jnp.max(s, axis=-1, keepdims=True)
        p = jnp.exp(s)
        p = p / jnp.sum(p, axis=-1, keepdims=True)
        ctx = jnp.dot(p, vh, preferred_element_type=jnp.float32)       # (S, hd)
        # fold head-concat + out-projection: concat(ctx_h) @ Wo == sum_h ctx_h @ Wo[rows_h]
        attn_out = attn_out + jnp.dot(ctx, wo[sl, :],
                                      preferred_element_type=jnp.float32)
    attn_out = attn_out + bo_ref[...]

    # dropout(p=0.0) == identity
    y = x + attn_out
    out_ref[0] = y if normalize_before else layer_norm(y)


def self_attention_layer(tgt, params, *, nhead, query_pos=None, tgt_mask=None,
                         tgt_key_padding_mask=None, normalize_before=False,
                         eps=1e-5):
    """JAX wrapper matching SelfAttentionLayer.forward; tgt is (B, S, D).

    params = (wq, wk, wv, wo, bq, bk, bv, bo, gamma, beta), with weight
    matrices already in x @ W layout (i.e. torch W.T).
    """
    tgt = tgt.astype(jnp.float32)
    B, S, D = tgt.shape
    assert D % nhead == 0

    if query_pos is None:
        query_pos = jnp.zeros((B, S, D), jnp.float32)
    else:
        query_pos = query_pos.astype(jnp.float32)

    # Fold attn_mask / key_padding_mask into one additive (B, S, S) bias.
    bias = jnp.zeros((B, S, S), jnp.float32)
    if tgt_mask is not None:
        tm = tgt_mask
        if tm.dtype == jnp.bool_:
            tm = jnp.where(tm, jnp.float32(-1e9), jnp.float32(0.0))
        bias = bias + tm.astype(jnp.float32)[None, :, :]
    if tgt_key_padding_mask is not None:
        kp = jnp.where(tgt_key_padding_mask, jnp.float32(-1e9), jnp.float32(0.0))
        bias = bias + kp.astype(jnp.float32)[:, None, :]

    wq, wk, wv, wo, bq, bk, bv, bo, gamma, beta = params

    kernel = functools.partial(
        _self_attention_layer_kernel,
        nhead=nhead, normalize_before=normalize_before, eps=float(eps))

    batch_spec = pl.BlockSpec((1, S, D), lambda b: (b, 0, 0))
    bias_spec = pl.BlockSpec((1, S, S), lambda b: (b, 0, 0))
    mat_spec = pl.BlockSpec((D, D), lambda b: (0, 0))    # resident across grid
    vec_spec = pl.BlockSpec((1, D), lambda b: (0, 0))

    return pl.pallas_call(
        kernel,
        out_shape=jax.ShapeDtypeStruct((B, S, D), jnp.float32),
        grid_spec=pltpu.PrefetchScalarGridSpec(
            num_scalar_prefetch=0,
            grid=(B,),
            in_specs=[batch_spec, batch_spec, bias_spec,
                      mat_spec, mat_spec, mat_spec, mat_spec,
                      vec_spec, vec_spec, vec_spec, vec_spec,
                      vec_spec, vec_spec],
            out_specs=batch_spec),
        compiler_params=pltpu.CompilerParams(
            dimension_semantics=("parallel",)),
    )(tgt, query_pos, bias,
      wq, wk, wv, wo, bq, bk, bv, bo, gamma, beta)


# --------------------------------------------------------------------------
# Pure-JAX reference (mirrors the torch module) and parameter construction.
# --------------------------------------------------------------------------
def _make_params(key, d_model):
    ks = jax.random.split(key, 10)
    lim = 1.0 / math.sqrt(d_model)

    def mat(k):
        return jax.random.uniform(k, (d_model, d_model), jnp.float32, -lim, lim)

    def vec(k):
        return 0.1 * jax.random.normal(k, (1, d_model), jnp.float32)

    wq, wk, wv, wo = mat(ks[0]), mat(ks[1]), mat(ks[2]), mat(ks[3])
    bq, bk, bv, bo = vec(ks[4]), vec(ks[5]), vec(ks[6]), vec(ks[7])
    gamma = 1.0 + 0.1 * jax.random.normal(ks[8], (1, d_model), jnp.float32)
    beta = 0.1 * jax.random.normal(ks[9], (1, d_model), jnp.float32)
    return (wq, wk, wv, wo, bq, bk, bv, bo, gamma, beta)


def _reference_jax(tgt, params, *, nhead, query_pos=None, tgt_mask=None,
                   tgt_key_padding_mask=None, normalize_before=False, eps=1e-5):
    wq, wk, wv, wo, bq, bk, bv, bo, gamma, beta = params
    B, S, D = tgt.shape
    hd = D // nhead

    def layer_norm(t):
        mu = t.mean(-1, keepdims=True)
        var = ((t - mu) ** 2).mean(-1, keepdims=True)
        return (t - mu) / jnp.sqrt(var + eps) * gamma + beta

    if query_pos is None:
        query_pos = jnp.zeros_like(tgt)
    bias = jnp.zeros((B, S, S), jnp.float32)
    if tgt_mask is not None:
        tm = tgt_mask
        if tm.dtype == jnp.bool_:
            tm = jnp.where(tm, -1e9, 0.0)
        bias = bias + tm.astype(jnp.float32)[None]
    if tgt_key_padding_mask is not None:
        bias = bias + jnp.where(tgt_key_padding_mask, -1e9, 0.0)[:, None, :]

    x = tgt
    xin = layer_norm(x) if normalize_before else x
    qk = xin + query_pos
    q = qk @ wq + bq
    k = qk @ wk + bk
    v = xin @ wv + bv
    qh = q.reshape(B, S, nhead, hd).transpose(0, 2, 1, 3)
    kh = k.reshape(B, S, nhead, hd).transpose(0, 2, 1, 3)
    vh = v.reshape(B, S, nhead, hd).transpose(0, 2, 1, 3)
    s = jnp.einsum('bhqd,bhkd->bhqk', qh, kh) / math.sqrt(hd) + bias[:, None]
    p = jax.nn.softmax(s, axis=-1)
    ctx = jnp.einsum('bhqk,bhkd->bhqd', p, vh).transpose(0, 2, 1, 3).reshape(B, S, D)
    attn_out = ctx @ wo + bo
    y = x + attn_out
    return y if normalize_before else layer_norm(y)


if __name__ == "__main__":
    key = jax.random.PRNGKey(0)
    B, S, D, NHEAD = 2, 8, 32, 4
    k_tgt, k_pos, k_par = jax.random.split(key, 3)
    tgt = jax.random.normal(k_tgt, (B, S, D), jnp.float32)
    query_pos = jax.random.normal(k_pos, (B, S, D), jnp.float32)
    params = _make_params(k_par, D)

    # Default path: normalize_before=False (forward_post), no masks.
    out = self_attention_layer(tgt, params, nhead=NHEAD, query_pos=query_pos)
    out = jax.block_until_ready(out)
    assert out.shape == (B, S, D)

    # Pre-norm path with a key-padding mask (masks the last two keys).
    pad = jnp.zeros((B, S), jnp.bool_).at[:, S - 2:].set(True)
    out_pre = self_attention_layer(tgt, params, nhead=NHEAD, query_pos=query_pos,
                                   tgt_key_padding_mask=pad,
                                   normalize_before=True)
    out_pre = jax.block_until_ready(out_pre)

    # Reference computed at full f32 matmul precision (kernel MXU matmuls are
    # f32 multi-pass); tolerance leaves headroom for pass-decomposition diffs.
    with jax.default_matmul_precision("float32"):
        ref = _reference_jax(tgt, params, nhead=NHEAD, query_pos=query_pos)
        ref_pre = _reference_jax(tgt, params, nhead=NHEAD, query_pos=query_pos,
                                 tgt_key_padding_mask=pad,
                                 normalize_before=True)
    assert jnp.max(jnp.abs(out - ref)) < 2e-3
    assert jnp.max(jnp.abs(out_pre - ref_pre)) < 2e-3

    # TODO(synk): dropout with p > 0 (training-mode RNG) not implemented;
    # module default dropout=0.0 makes it an identity in this forward pass.
    print("KERNEL_OK")
</pallas_src>

<mosaic_0001>
module attributes {stable_mosaic.version = 11 : i64} {
  func.func @_self_attention_layer_kernel(%arg0: i32, %arg1: memref<1x8x32xf32, #tpu.memory_space<vmem>>, %arg2: memref<1x8x32xf32, #tpu.memory_space<vmem>>, %arg3: memref<1x8x8xf32, #tpu.memory_space<vmem>>, %arg4: memref<32x32xf32, #tpu.memory_space<vmem>>, %arg5: memref<32x32xf32, #tpu.memory_space<vmem>>, %arg6: memref<32x32xf32, #tpu.memory_space<vmem>>, %arg7: memref<32x32xf32, #tpu.memory_space<vmem>>, %arg8: memref<1x32xf32, #tpu.memory_space<vmem>>, %arg9: memref<1x32xf32, #tpu.memory_space<vmem>>, %arg10: memref<1x32xf32, #tpu.memory_space<vmem>>, %arg11: memref<1x32xf32, #tpu.memory_space<vmem>>, %arg12: memref<1x32xf32, #tpu.memory_space<vmem>>, %arg13: memref<1x32xf32, #tpu.memory_space<vmem>>, %arg14: memref<1x8x32xf32, #tpu.memory_space<vmem>>) attributes {dimension_semantics = [#tpu.dimension_semantics<parallel>], iteration_bounds = array<i64: 2>, scalar_prefetch = 0 : i64, scratch_operands = 0 : i64, tpu.core_type = #tpu.core_type<tc>, window_params = [{transform_indices = @transform_0, window_bounds = array<i64: 1, 8, 32>}, {transform_indices = @transform_1, window_bounds = array<i64: 1, 8, 32>}, {transform_indices = @transform_2, window_bounds = array<i64: 1, 8, 8>}, {pipeline_mode = #tpu.pipeline_mode<synchronous>, transform_indices = @transform_3, window_bounds = array<i64: 32, 32>}, {pipeline_mode = #tpu.pipeline_mode<synchronous>, transform_indices = @transform_4, window_bounds = array<i64: 32, 32>}, {pipeline_mode = #tpu.pipeline_mode<synchronous>, transform_indices = @transform_5, window_bounds = array<i64: 32, 32>}, {pipeline_mode = #tpu.pipeline_mode<synchronous>, transform_indices = @transform_6, window_bounds = array<i64: 32, 32>}, {pipeline_mode = #tpu.pipeline_mode<synchronous>, transform_indices = @transform_7, window_bounds = array<i64: 1, 32>}, {pipeline_mode = #tpu.pipeline_mode<synchronous>, transform_indices = @transform_8, window_bounds = array<i64: 1, 32>}, {pipeline_mode = #tpu.pipeline_mode<synchronous>, transform_indices = @transform_9, window_bounds = array<i64: 1, 32>}, {pipeline_mode = #tpu.pipeline_mode<synchronous>, transform_indices = @transform_10, window_bounds = array<i64: 1, 32>}, {pipeline_mode = #tpu.pipeline_mode<synchronous>, transform_indices = @transform_11, window_bounds = array<i64: 1, 32>}, {pipeline_mode = #tpu.pipeline_mode<synchronous>, transform_indices = @transform_12, window_bounds = array<i64: 1, 32>}, {transform_indices = @transform_13, window_bounds = array<i64: 1, 8, 32>}]} {
    %c0 = arith.constant 0 : index
    %c0_0 = arith.constant 0 : index
    %c0_1 = arith.constant 0 : index
    %0 = vector.load %arg1[%c0, %c0_0, %c0_1] : memref<1x8x32xf32, #tpu.memory_space<vmem>>, vector<1x8x32xf32>
    %1 = vector.shape_cast %0 : vector<1x8x32xf32> to vector<8x32xf32>
    %c0_2 = arith.constant 0 : index
    %c0_3 = arith.constant 0 : index
    %c0_4 = arith.constant 0 : index
    %2 = vector.load %arg2[%c0_2, %c0_3, %c0_4] : memref<1x8x32xf32, #tpu.memory_space<vmem>>, vector<1x8x32xf32>
    %3 = vector.shape_cast %2 : vector<1x8x32xf32> to vector<8x32xf32>
    %c0_5 = arith.constant 0 : index
    %c0_6 = arith.constant 0 : index
    %c0_7 = arith.constant 0 : index
    %4 = vector.load %arg3[%c0_5, %c0_6, %c0_7] : memref<1x8x8xf32, #tpu.memory_space<vmem>>, vector<1x8x8xf32>
    %5 = vector.shape_cast %4 : vector<1x8x8xf32> to vector<8x8xf32>
    %c0_8 = arith.constant 0 : index
    %c0_9 = arith.constant 0 : index
    %6 = vector.load %arg12[%c0_8, %c0_9] : memref<1x32xf32, #tpu.memory_space<vmem>>, vector<1x32xf32>
    %c0_10 = arith.constant 0 : index
    %c0_11 = arith.constant 0 : index
    %7 = vector.load %arg13[%c0_10, %c0_11] : memref<1x32xf32, #tpu.memory_space<vmem>>, vector<1x32xf32>
    %8 = arith.addf %1, %3 : vector<8x32xf32>
    %c0_12 = arith.constant 0 : index
    %c0_13 = arith.constant 0 : index
    %9 = vector.load %arg4[%c0_12, %c0_13] : memref<32x32xf32, #tpu.memory_space<vmem>>, vector<32x32xf32>
    %cst = arith.constant dense<0.000000e+00> : vector<8x32xf32>
    %10 = tpu.matmul %8, %9, %cst {dimension_numbers = #tpu.dot_dimension_numbers<[1], [0], [0], [1], [0, 0, 1, 1], [], []>} : vector<8x32xf32>, vector<32x32xf32>, vector<8x32xf32> -> vector<8x32xf32>
    %c0_14 = arith.constant 0 : index
    %c0_15 = arith.constant 0 : index
    %11 = vector.load %arg8[%c0_14, %c0_15] : memref<1x32xf32, #tpu.memory_space<vmem>>, vector<1x32xf32>
    %12 = vector.broadcast %11 : vector<1x32xf32> to vector<8x32xf32>
    %13 = arith.addf %10, %12 : vector<8x32xf32>
    %c0_16 = arith.constant 0 : index
    %c0_17 = arith.constant 0 : index
    %14 = vector.load %arg5[%c0_16, %c0_17] : memref<32x32xf32, #tpu.memory_space<vmem>>, vector<32x32xf32>
    %cst_18 = arith.constant dense<0.000000e+00> : vector<8x32xf32>
    %15 = tpu.matmul %8, %14, %cst_18 {dimension_numbers = #tpu.dot_dimension_numbers<[1], [0], [0], [1], [0, 0, 1, 1], [], []>} : vector<8x32xf32>, vector<32x32xf32>, vector<8x32xf32> -> vector<8x32xf32>
    %c0_19 = arith.constant 0 : index
    %c0_20 = arith.constant 0 : index
    %16 = vector.load %arg9[%c0_19, %c0_20] : memref<1x32xf32, #tpu.memory_space<vmem>>, vector<1x32xf32>
    %17 = vector.broadcast %16 : vector<1x32xf32> to vector<8x32xf32>
    %18 = arith.addf %15, %17 : vector<8x32xf32>
    %c0_21 = arith.constant 0 : index
    %c0_22 = arith.constant 0 : index
    %19 = vector.load %arg6[%c0_21, %c0_22] : memref<32x32xf32, #tpu.memory_space<vmem>>, vector<32x32xf32>
    %cst_23 = arith.constant dense<0.000000e+00> : vector<8x32xf32>
    %20 = tpu.matmul %1, %19, %cst_23 {dimension_numbers = #tpu.dot_dimension_numbers<[1], [0], [0], [1], [0, 0, 1, 1], [], []>} : vector<8x32xf32>, vector<32x32xf32>, vector<8x32xf32> -> vector<8x32xf32>
    %c0_24 = arith.constant 0 : index
    %c0_25 = arith.constant 0 : index
    %21 = vector.load %arg10[%c0_24, %c0_25] : memref<1x32xf32, #tpu.memory_space<vmem>>, vector<1x32xf32>
    %22 = vector.broadcast %21 : vector<1x32xf32> to vector<8x32xf32>
    %23 = arith.addf %20, %22 : vector<8x32xf32>
    %c0_26 = arith.constant 0 : index
    %c0_27 = arith.constant 0 : index
    %24 = vector.load %arg7[%c0_26, %c0_27] : memref<32x32xf32, #tpu.memory_space<vmem>>, vector<32x32xf32>
    %cst_28 = arith.constant 0.000000e+00 : f32
    %25 = vector.broadcast %cst_28 : f32 to vector<8x32xf32>
    %26 = vector.extract_strided_slice %13 {offsets = [0, 0], sizes = [8, 8], strides = [1, 1]} : vector<8x32xf32> to vector<8x8xf32>
    %27 = vector.extract_strided_slice %18 {offsets = [0, 0], sizes = [8, 8], strides = [1, 1]} : vector<8x32xf32> to vector<8x8xf32>
    %28 = vector.extract_strided_slice %23 {offsets = [0, 0], sizes = [8, 8], strides = [1, 1]} : vector<8x32xf32> to vector<8x8xf32>
    "tpu.trace_start"() <{level = 10 : i32, message = "qd,kd->qk"}> : () -> ()
    %cst_29 = arith.constant dense<0.000000e+00> : vector<8x8xf32>
    %29 = tpu.matmul %26, %27, %cst_29 {dimension_numbers = #tpu.dot_dimension_numbers<[1], [1], [0], [0], [0, 0, 1, 0], [], []>} : vector<8x8xf32>, vector<8x8xf32>, vector<8x8xf32> -> vector<8x8xf32>
    "tpu.trace_stop"() : () -> ()
    %cst_30 = arith.constant 0.353553385 : f32
    %30 = vector.broadcast %cst_30 : f32 to vector<8x8xf32>
    %31 = arith.mulf %29, %30 : vector<8x8xf32>
    %32 = arith.addf %31, %5 : vector<8x8xf32>
    %cst_31 = arith.constant dense<0xFF800000> : vector<8xf32>
    %33 = vector.multi_reduction <maximumf>, %32, %cst_31 [1] : vector<8x8xf32> to vector<8xf32>
    %34 = vector.shape_cast %33 : vector<8xf32> to vector<8x1xf32>
    %35 = vector.broadcast %34 : vector<8x1xf32> to vector<8x8xf32>
    %36 = arith.subf %32, %35 : vector<8x8xf32>
    %37 = math.exp %36 : vector<8x8xf32>
    %cst_32 = arith.constant dense<0.000000e+00> : vector<8xf32>
    %38 = vector.multi_reduction <add>, %37, %cst_32 [1] : vector<8x8xf32> to vector<8xf32>
    %39 = vector.shape_cast %38 : vector<8xf32> to vector<8x1xf32>
    %40 = vector.broadcast %39 : vector<8x1xf32> to vector<8x8xf32>
    %41 = arith.divf %37, %40 : vector<8x8xf32>
    %cst_33 = arith.constant dense<0.000000e+00> : vector<8x8xf32>
    %42 = tpu.matmul %41, %28, %cst_33 {dimension_numbers = #tpu.dot_dimension_numbers<[1], [0], [0], [1], [0, 0, 1, 1], [], []>} : vector<8x8xf32>, vector<8x8xf32>, vector<8x8xf32> -> vector<8x8xf32>
    %43 = vector.extract_strided_slice %24 {offsets = [0, 0], sizes = [8, 32], strides = [1, 1]} : vector<32x32xf32> to vector<8x32xf32>
    %cst_34 = arith.constant dense<0.000000e+00> : vector<8x32xf32>
    %44 = tpu.matmul %42, %43, %cst_34 {dimension_numbers = #tpu.dot_dimension_numbers<[1], [0], [0], [1], [0, 0, 1, 1], [], []>} : vector<8x8xf32>, vector<8x32xf32>, vector<8x32xf32> -> vector<8x32xf32>
    %45 = arith.addf %25, %44 : vector<8x32xf32>
    %46 = vector.extract_strided_slice %13 {offsets = [0, 8], sizes = [8, 8], strides = [1, 1]} : vector<8x32xf32> to vector<8x8xf32>
    %47 = vector.extract_strided_slice %18 {offsets = [0, 8], sizes = [8, 8], strides = [1, 1]} : vector<8x32xf32> to vector<8x8xf32>
    %48 = vector.extract_strided_slice %23 {offsets = [0, 8], sizes = [8, 8], strides = [1, 1]} : vector<8x32xf32> to vector<8x8xf32>
    "tpu.trace_start"() <{level = 10 : i32, message = "qd,kd->qk"}> : () -> ()
    %cst_35 = arith.constant dense<0.000000e+00> : vector<8x8xf32>
    %49 = tpu.matmul %46, %47, %cst_35 {dimension_numbers = #tpu.dot_dimension_numbers<[1], [1], [0], [0], [0, 0, 1, 0], [], []>} : vector<8x8xf32>, vector<8x8xf32>, vector<8x8xf32> -> vector<8x8xf32>
    "tpu.trace_stop"() : () -> ()
    %cst_36 = arith.constant 0.353553385 : f32
    %50 = vector.broadcast %cst_36 : f32 to vector<8x8xf32>
    %51 = arith.mulf %49, %50 : vector<8x8xf32>
    %52 = arith.addf %51, %5 : vector<8x8xf32>
    %cst_37 = arith.constant dense<0xFF800000> : vector<8xf32>
    %53 = vector.multi_reduction <maximumf>, %52, %cst_37 [1] : vector<8x8xf32> to vector<8xf32>
    %54 = vector.shape_cast %53 : vector<8xf32> to vector<8x1xf32>
    %55 = vector.broadcast %54 : vector<8x1xf32> to vector<8x8xf32>
    %56 = arith.subf %52, %55 : vector<8x8xf32>
    %57 = math.exp %56 : vector<8x8xf32>
    %cst_38 = arith.constant dense<0.000000e+00> : vector<8xf32>
    %58 = vector.multi_reduction <add>, %57, %cst_38 [1] : vector<8x8xf32> to vector<8xf32>
    %59 = vector.shape_cast %58 : vector<8xf32> to vector<8x1xf32>
    %60 = vector.broadcast %59 : vector<8x1xf32> to vector<8x8xf32>
    %61 = arith.divf %57, %60 : vector<8x8xf32>
    %cst_39 = arith.constant dense<0.000000e+00> : vector<8x8xf32>
    %62 = tpu.matmul %61, %48, %cst_39 {dimension_numbers = #tpu.dot_dimension_numbers<[1], [0], [0], [1], [0, 0, 1, 1], [], []>} : vector<8x8xf32>, vector<8x8xf32>, vector<8x8xf32> -> vector<8x8xf32>
    %63 = vector.extract_strided_slice %24 {offsets = [8, 0], sizes = [8, 32], strides = [1, 1]} : vector<32x32xf32> to vector<8x32xf32>
    %cst_40 = arith.constant dense<0.000000e+00> : vector<8x32xf32>
    %64 = tpu.matmul %62, %63, %cst_40 {dimension_numbers = #tpu.dot_dimension_numbers<[1], [0], [0], [1], [0, 0, 1, 1], [], []>} : vector<8x8xf32>, vector<8x32xf32>, vector<8x32xf32> -> vector<8x32xf32>
    %65 = arith.addf %45, %64 : vector<8x32xf32>
    %66 = vector.extract_strided_slice %13 {offsets = [0, 16], sizes = [8, 8], strides = [1, 1]} : vector<8x32xf32> to vector<8x8xf32>
    %67 = vector.extract_strided_slice %18 {offsets = [0, 16], sizes = [8, 8], strides = [1, 1]} : vector<8x32xf32> to vector<8x8xf32>
    %68 = vector.extract_strided_slice %23 {offsets = [0, 16], sizes = [8, 8], strides = [1, 1]} : vector<8x32xf32> to vector<8x8xf32>
    "tpu.trace_start"() <{level = 10 : i32, message = "qd,kd->qk"}> : () -> ()
    %cst_41 = arith.constant dense<0.000000e+00> : vector<8x8xf32>
    %69 = tpu.matmul %66, %67, %cst_41 {dimension_numbers = #tpu.dot_dimension_numbers<[1], [1], [0], [0], [0, 0, 1, 0], [], []>} : vector<8x8xf32>, vector<8x8xf32>, vector<8x8xf32> -> vector<8x8xf32>
    "tpu.trace_stop"() : () -> ()
    %cst_42 = arith.constant 0.353553385 : f32
    %70 = vector.broadcast %cst_42 : f32 to vector<8x8xf32>
    %71 = arith.mulf %69, %70 : vector<8x8xf32>
    %72 = arith.addf %71, %5 : vector<8x8xf32>
    %cst_43 = arith.constant dense<0xFF800000> : vector<8xf32>
    %73 = vector.multi_reduction <maximumf>, %72, %cst_43 [1] : vector<8x8xf32> to vector<8xf32>
    %74 = vector.shape_cast %73 : vector<8xf32> to vector<8x1xf32>
    %75 = vector.broadcast %74 : vector<8x1xf32> to vector<8x8xf32>
    %76 = arith.subf %72, %75 : vector<8x8xf32>
    %77 = math.exp %76 : vector<8x8xf32>
    %cst_44 = arith.constant dense<0.000000e+00> : vector<8xf32>
    %78 = vector.multi_reduction <add>, %77, %cst_44 [1] : vector<8x8xf32> to vector<8xf32>
    %79 = vector.shape_cast %78 : vector<8xf32> to vector<8x1xf32>
    %80 = vector.broadcast %79 : vector<8x1xf32> to vector<8x8xf32>
    %81 = arith.divf %77, %80 : vector<8x8xf32>
    %cst_45 = arith.constant dense<0.000000e+00> : vector<8x8xf32>
    %82 = tpu.matmul %81, %68, %cst_45 {dimension_numbers = #tpu.dot_dimension_numbers<[1], [0], [0], [1], [0, 0, 1, 1], [], []>} : vector<8x8xf32>, vector<8x8xf32>, vector<8x8xf32> -> vector<8x8xf32>
    %83 = vector.extract_strided_slice %24 {offsets = [16, 0], sizes = [8, 32], strides = [1, 1]} : vector<32x32xf32> to vector<8x32xf32>
    %cst_46 = arith.constant dense<0.000000e+00> : vector<8x32xf32>
    %84 = tpu.matmul %82, %83, %cst_46 {dimension_numbers = #tpu.dot_dimension_numbers<[1], [0], [0], [1], [0, 0, 1, 1], [], []>} : vector<8x8xf32>, vector<8x32xf32>, vector<8x32xf32> -> vector<8x32xf32>
    %85 = arith.addf %65, %84 : vector<8x32xf32>
    %86 = vector.extract_strided_slice %13 {offsets = [0, 24], sizes = [8, 8], strides = [1, 1]} : vector<8x32xf32> to vector<8x8xf32>
    %87 = vector.extract_strided_slice %18 {offsets = [0, 24], sizes = [8, 8], strides = [1, 1]} : vector<8x32xf32> to vector<8x8xf32>
    %88 = vector.extract_strided_slice %23 {offsets = [0, 24], sizes = [8, 8], strides = [1, 1]} : vector<8x32xf32> to vector<8x8xf32>
    "tpu.trace_start"() <{level = 10 : i32, message = "qd,kd->qk"}> : () -> ()
    %cst_47 = arith.constant dense<0.000000e+00> : vector<8x8xf32>
    %89 = tpu.matmul %86, %87, %cst_47 {dimension_numbers = #tpu.dot_dimension_numbers<[1], [1], [0], [0], [0, 0, 1, 0], [], []>} : vector<8x8xf32>, vector<8x8xf32>, vector<8x8xf32> -> vector<8x8xf32>
    "tpu.trace_stop"() : () -> ()
    %cst_48 = arith.constant 0.353553385 : f32
    %90 = vector.broadcast %cst_48 : f32 to vector<8x8xf32>
    %91 = arith.mulf %89, %90 : vector<8x8xf32>
    %92 = arith.addf %91, %5 : vector<8x8xf32>
    %cst_49 = arith.constant dense<0xFF800000> : vector<8xf32>
    %93 = vector.multi_reduction <maximumf>, %92, %cst_49 [1] : vector<8x8xf32> to vector<8xf32>
    %94 = vector.shape_cast %93 : vector<8xf32> to vector<8x1xf32>
    %95 = vector.broadcast %94 : vector<8x1xf32> to vector<8x8xf32>
    %96 = arith.subf %92, %95 : vector<8x8xf32>
    %97 = math.exp %96 : vector<8x8xf32>
    %cst_50 = arith.constant dense<0.000000e+00> : vector<8xf32>
    %98 = vector.multi_reduction <add>, %97, %cst_50 [1] : vector<8x8xf32> to vector<8xf32>
    %99 = vector.shape_cast %98 : vector<8xf32> to vector<8x1xf32>
    %100 = vector.broadcast %99 : vector<8x1xf32> to vector<8x8xf32>
    %101 = arith.divf %97, %100 : vector<8x8xf32>
    %cst_51 = arith.constant dense<0.000000e+00> : vector<8x8xf32>
    %102 = tpu.matmul %101, %88, %cst_51 {dimension_numbers = #tpu.dot_dimension_numbers<[1], [0], [0], [1], [0, 0, 1, 1], [], []>} : vector<8x8xf32>, vector<8x8xf32>, vector<8x8xf32> -> vector<8x8xf32>
    %103 = vector.extract_strided_slice %24 {offsets = [24, 0], sizes = [8, 32], strides = [1, 1]} : vector<32x32xf32> to vector<8x32xf32>
    %cst_52 = arith.constant dense<0.000000e+00> : vector<8x32xf32>
    %104 = tpu.matmul %102, %103, %cst_52 {dimension_numbers = #tpu.dot_dimension_numbers<[1], [0], [0], [1], [0, 0, 1, 1], [], []>} : vector<8x8xf32>, vector<8x32xf32>, vector<8x32xf32> -> vector<8x32xf32>
    %105 = arith.addf %85, %104 : vector<8x32xf32>
    %c0_53 = arith.constant 0 : index
    %c0_54 = arith.constant 0 : index
    %106 = vector.load %arg11[%c0_53, %c0_54] : memref<1x32xf32, #tpu.memory_space<vmem>>, vector<1x32xf32>
    %107 = vector.broadcast %106 : vector<1x32xf32> to vector<8x32xf32>
    %108 = arith.addf %105, %107 : vector<8x32xf32>
    %109 = arith.addf %1, %108 : vector<8x32xf32>
    %cst_55 = arith.constant dense<0.000000e+00> : vector<8xf32>
    %110 = vector.multi_reduction <add>, %109, %cst_55 [1] : vector<8x32xf32> to vector<8xf32>
    %111 = vector.shape_cast %110 : vector<8xf32> to vector<8x1xf32>
    %cst_56 = arith.constant 3.200000e+01 : f32
    %112 = vector.broadcast %cst_56 : f32 to vector<8x1xf32>
    %113 = arith.divf %111, %112 : vector<8x1xf32>
    %114 = vector.broadcast %113 : vector<8x1xf32> to vector<8x32xf32>
    %115 = arith.subf %109, %114 : vector<8x32xf32>
    %116 = arith.mulf %115, %115 : vector<8x32xf32>
    %cst_57 = arith.constant dense<0.000000e+00> : vector<8xf32>
    %117 = vector.multi_reduction <add>, %116, %cst_57 [1] : vector<8x32xf32> to vector<8xf32>
    %118 = vector.shape_cast %117 : vector<8xf32> to vector<8x1xf32>
    %cst_58 = arith.constant 3.200000e+01 : f32
    %119 = vector.broadcast %cst_58 : f32 to vector<8x1xf32>
    %120 = arith.divf %118, %119 : vector<8x1xf32>
    %cst_59 = arith.constant 9.99999974E-6 : f32
    %121 = vector.broadcast %cst_59 : f32 to vector<8x1xf32>
    %122 = arith.addf %120, %121 : vector<8x1xf32>
    %123 = math.rsqrt %122 : vector<8x1xf32>
    %124 = vector.broadcast %123 : vector<8x1xf32> to vector<8x32xf32>
    %125 = arith.mulf %115, %124 : vector<8x32xf32>
    %126 = vector.broadcast %6 : vector<1x32xf32> to vector<8x32xf32>
    %127 = arith.mulf %125, %126 : vector<8x32xf32>
    %128 = vector.broadcast %7 : vector<1x32xf32> to vector<8x32xf32>
    %129 = arith.addf %127, %128 : vector<8x32xf32>
    %c0_60 = arith.constant 0 : index
    %c0_61 = arith.constant 0 : index
    %c0_62 = arith.constant 0 : index
    %130 = vector.load %arg14[%c0_60, %c0_61, %c0_62] : memref<1x8x32xf32, #tpu.memory_space<vmem>>, vector<1x8x32xf32>
    %131 = vector.shape_cast %130 : vector<1x8x32xf32> to vector<8x32xf32>
    %132 = vector.shape_cast %129 : vector<8x32xf32> to vector<1x8x32xf32>
    tpu.vector_store %arg14[%c0_60, %c0_61, %c0_62], %132 {strides = array<i32>} : memref<1x8x32xf32, #tpu.memory_space<vmem>>, vector<1x8x32xf32>,
    return
  }
  func.func @transform_0(%arg0: i32) -> (i32, i32, i32) {
    %c0_i32 = arith.constant 0 : i32
    %c0_i32_0 = arith.constant 0 : i32
    %c0_i32_1 = arith.constant 0 : i32
    return %arg0, %c0_i32, %c0_i32_0 : i32, i32, i32
  }
  func.func @transform_1(%arg0: i32) -> (i32, i32, i32) {
    %c0_i32 = arith.constant 0 : i32
    %c0_i32_0 = arith.constant 0 : i32
    %c0_i32_1 = arith.constant 0 : i32
    return %arg0, %c0_i32, %c0_i32_0 : i32, i32, i32
  }
  func.func @transform_2(%arg0: i32) -> (i32, i32, i32) {
    %c0_i32 = arith.constant 0 : i32
    %c0_i32_0 = arith.constant 0 : i32
    %c0_i32_1 = arith.constant 0 : i32
    return %arg0, %c0_i32, %c0_i32_0 : i32, i32, i32
  }
  func.func @transform_3(%arg0: i32) -> (i32, i32) {
    %c0_i32 = arith.constant 0 : i32
    %c0_i32_0 = arith.constant 0 : i32
    %c0_i32_1 = arith.constant 0 : i32
    return %c0_i32, %c0_i32_0 : i32, i32
  }
  func.func @transform_4(%arg0: i32) -> (i32, i32) {
    %c0_i32 = arith.constant 0 : i32
    %c0_i32_0 = arith.constant 0 : i32
    %c0_i32_1 = arith.constant 0 : i32
    return %c0_i32, %c0_i32_0 : i32, i32
  }
  func.func @transform_5(%arg0: i32) -> (i32, i32) {
    %c0_i32 = arith.constant 0 : i32
    %c0_i32_0 = arith.constant 0 : i32
    %c0_i32_1 = arith.constant 0 : i32
    return %c0_i32, %c0_i32_0 : i32, i32
  }
  func.func @transform_6(%arg0: i32) -> (i32, i32) {
    %c0_i32 = arith.constant 0 : i32
    %c0_i32_0 = arith.constant 0 : i32
    %c0_i32_1 = arith.constant 0 : i32
    return %c0_i32, %c0_i32_0 : i32, i32
  }
  func.func @transform_7(%arg0: i32) -> (i32, i32) {
    %c0_i32 = arith.constant 0 : i32
    %c0_i32_0 = arith.constant 0 : i32
    %c0_i32_1 = arith.constant 0 : i32
    return %c0_i32, %c0_i32_0 : i32, i32
  }
  func.func @transform_8(%arg0: i32) -> (i32, i32) {
    %c0_i32 = arith.constant 0 : i32
    %c0_i32_0 = arith.constant 0 : i32
    %c0_i32_1 = arith.constant 0 : i32
    return %c0_i32, %c0_i32_0 : i32, i32
  }
  func.func @transform_9(%arg0: i32) -> (i32, i32) {
    %c0_i32 = arith.constant 0 : i32
    %c0_i32_0 = arith.constant 0 : i32
    %c0_i32_1 = arith.constant 0 : i32
    return %c0_i32, %c0_i32_0 : i32, i32
  }
  func.func @transform_10(%arg0: i32) -> (i32, i32) {
    %c0_i32 = arith.constant 0 : i32
    %c0_i32_0 = arith.constant 0 : i32
    %c0_i32_1 = arith.constant 0 : i32
    return %c0_i32, %c0_i32_0 : i32, i32
  }
  func.func @transform_11(%arg0: i32) -> (i32, i32) {
    %c0_i32 = arith.constant 0 : i32
    %c0_i32_0 = arith.constant 0 : i32
    %c0_i32_1 = arith.constant 0 : i32
    return %c0_i32, %c0_i32_0 : i32, i32
  }
  func.func @transform_12(%arg0: i32) -> (i32, i32) {
    %c0_i32 = arith.constant 0 : i32
    %c0_i32_0 = arith.constant 0 : i32
    %c0_i32_1 = arith.constant 0 : i32
    return %c0_i32, %c0_i32_0 : i32, i32
  }
  func.func @transform_13(%arg0: i32) -> (i32, i32, i32) {
    %c0_i32 = arith.constant 0 : i32
    %c0_i32_0 = arith.constant 0 : i32
    %c0_i32_1 = arith.constant 0 : i32
    return %arg0, %c0_i32, %c0_i32_0 : i32, i32, i32
  }
}

</mosaic_0001>

<llo_original>
// kernel: tpu_custom_call.1
$region0: #{tpu_custom_call.1}
  #allocation0 [shape = 'u32[]', space=smem, size = 0x4, offset = 0x4, fixed_abs, tag = 'smem constant byte address 0x4 - core index']
  #allocation1 [shape = 'u32[144,128]{1,0:T(1,128)}', space=vmem, size = 0x12000, scoped, tag = 'internal scratch']
  %s0 = inlined_call_operand.hbm [shape: f32[2,8,32], index: 0, kind: input, shape index: {}]
  %s1 = inlined_call_operand.hbm [shape: f32[2,8,32], index: 1, kind: input, shape index: {}]
  %s2 = inlined_call_operand.hbm [shape: f32[2,8,8], index: 2, kind: input, shape index: {}]
  %s3 = inlined_call_operand.hbm [shape: f32[32,32], index: 3, kind: input, shape index: {}]
  %s4 = inlined_call_operand.hbm [shape: f32[32,32], index: 4, kind: input, shape index: {}]
  %s5 = inlined_call_operand.hbm [shape: f32[32,32], index: 5, kind: input, shape index: {}]
  %s6 = inlined_call_operand.hbm [shape: f32[32,32], index: 6, kind: input, shape index: {}]
  %s7 = inlined_call_operand.vmem [shape: f32[1,32], index: 7, kind: input, shape index: {}]
  %s8 = inlined_call_operand.vmem [shape: f32[1,32], index: 8, kind: input, shape index: {}]
  %s9 = inlined_call_operand.vmem [shape: f32[1,32], index: 9, kind: input, shape index: {}]
  %s10 = inlined_call_operand.vmem [shape: f32[1,32], index: 10, kind: input, shape index: {}]
  %s11 = inlined_call_operand.vmem [shape: f32[1,32], index: 11, kind: input, shape index: {}]
  %s12 = inlined_call_operand.vmem [shape: f32[1,32], index: 12, kind: input, shape index: {}]
  %s13 = inlined_call_operand.hbm [shape: f32[2,8,32], index: 13, kind: output, shape index: {}]
  %s14 = sld [smem:[#allocation0]]
  $region113: #{tpu_custom_call.1} parent=0
    _
  %s16 = ssub.s32 1, %s14
  %s17 = scalar_select 0, %s16, %s14
  $region1: #{tpu_custom_call.1} parent=0
    #allocation2 [shape = 'u8[8192]{0}', space=vmem, size = 0x2000, scoped, tag = 'input window, operand 0']
    #allocation3 [shape = 's32[2]{0}', space=sflag, size = 0x8, scoped, tag = 'scoped memory for tpu_custom_call.1']
    #allocation4 [shape = 's32[2]{0}', space=sflag, size = 0x8, scoped, tag = 'scoped memory for tpu_custom_call.1']
    #allocation5 [shape = 'u8[8192]{0}', space=vmem, size = 0x2000, scoped, tag = 'input window, operand 1']
    #allocation6 [shape = 's32[2]{0}', space=sflag, size = 0x8, scoped, tag = 'scoped memory for tpu_custom_call.1']
    #allocation7 [shape = 'u8[8192]{0}', space=vmem, size = 0x2000, scoped, tag = 'input window, operand 2']
    #allocation8 [shape = 'u8[16384]{0}', space=vmem, size = 0x4000, scoped, tag = 'input window, operand 3, single buffered']
    #allocation9 [shape = 's32[1]{0}', space=sflag, size = 0x4, scoped, tag = 'scoped memory for tpu_custom_call.1']
    #allocation10 [shape = 'u8[16384]{0}', space=vmem, size = 0x4000, scoped, tag = 'input window, operand 4, single buffered']
    #allocation11 [shape = 'u8[16384]{0}', space=vmem, size = 0x4000, scoped, tag = 'input window, operand 5, single buffered']
    #allocation12 [shape = 's32[1]{0}', space=sflag, size = 0x4, scoped, tag = 'scoped memory for tpu_custom_call.1']
    #allocation13 [shape = 'u8[16384]{0}', space=vmem, size = 0x4000, scoped, tag = 'input window, operand 6, single buffered']
    #allocation14 [shape = 'u8[8192]{0}', space=vmem, size = 0x2000, scoped, tag = 'output window, operand 0']
    %18 = vsyncpa [#allocation3], 0
    %s19 = scalar_lea.sflag [#allocation3], 1
    %20 = vsyncpa %s19, 0
    %21 = vsyncpa [#allocation6], 0
    %s22 = scalar_lea.sflag [#allocation6], 1
    %23 = vsyncpa %s22, 0
    %24 = vsyncpa [#allocation9], 0
    %25 = vsyncpa [#allocation12], 0
    %26 = vsyncpa [#allocation4], 0
    %s27 = scalar_lea.sflag [#allocation4], 1
    %28 = vsyncpa %s27, 0
    loop: start=0, step=1, limit=4
    $region2: #{tpu_custom_call.1} parent=1 // loop_pre_header
      _
    $region3: #{tpu_custom_call.1} parent=1 // loop_header
      %s30 = sphi 0, %s34
      %p31 = scmp.ge.s32.totalorder %s30, 4
      %s40 = sphi 0, %s42
      %s43 = sphi 0, %s40
      %s44 = sphi 0, %s43
      %s60 = sphi 0, %s44
      %s66 = sphi 0, %s68
      %s69 = sphi 0, %s66
      %s70 = sphi 0, %s69
      %s86 = sphi 0, %s70
      %s92 = sphi 0, %s94
      %s95 = sphi 0, %s92
      %s96 = sphi 0, %s95
      %s112 = sphi 0, %s96
      %s116 = sphi 0, %s116
      %s118 = sphi 0, %s116
      %s119 = sphi 0, %s118
      %s133 = sphi 0, %s119
      %s137 = sphi 0, %s137
      %s139 = sphi 0, %s137
      %s140 = sphi 0, %s139
      %s154 = sphi 0, %s140
      %s158 = sphi 0, %s158
      %s160 = sphi 0, %s158
      %s161 = sphi 0, %s160
      %s175 = sphi 0, %s161
      %s179 = sphi 0, %s179
      %s181 = sphi 0, %s179
      %s182 = sphi 0, %s181
      %s196 = sphi 0, %s182
      %s200 = sphi 0, %s200
      %s202 = sphi 0, %s200
      %s203 = sphi 0, %s202
      %s217 = sphi 0, %s203
      %s221 = sphi 0, %s221
      %s223 = sphi 0, %s221
      %s224 = sphi 0, %s223
      %s238 = sphi 0, %s224
      %s242 = sphi 0, %s242
      %s244 = sphi 0, %s242
      %s245 = sphi 0, %s244
      %s259 = sphi 0, %s245
      %s263 = sphi 0, %s263
      %s265 = sphi 0, %s263
      %s266 = sphi 0, %s265
      %s280 = sphi 0, %s266
      %s284 = sphi 0, %s284
      %s286 = sphi 0, %s284
      %s287 = sphi 0, %s286
      %s301 = sphi 0, %s287
      %s305 = sphi 0, %s305
      %s307 = sphi 0, %s305
      %s308 = sphi 0, %s307
      %s322 = sphi 0, %s308
      %s328 = sphi 0, %s330
      %s331 = sphi 0, %s328
      %s332 = sphi 0, %s331
      %s348 = sphi 0, %s332
    $region4: #{tpu_custom_call.1} parent=1 // loop_header_branch
      %33 = sbr.rel (%p31) target = $region8
    $region5: #{tpu_custom_call.1} parent=1 // loop_body
      %s35 = ssub.s32 %s30, 1
      %s36 = ssub.s32 %s30, 2
      %s37 = sadd.s32 %s30, 1
      %s38 = ssub.s32 %s30, %s37
      %p39 = scmp.eq.s32.totalorder %s38, 0
      %s41 = sadd.s32 %s40, 1
      %s42 = scalar_select %p39, %s40, %s41
      %p45 = pneg %p39
      %p46 = scmp.eq.s32.totalorder %s30, 1
      %p47 = por %p45, %p46
      %p48 = scmp.ne.s32.totalorder %s40, %s43
      %p49 = scmp.eq.s32.totalorder %s30, 0
      %p50 = por %p48, %p49
      %p51 = scmp.ne.s32.totalorder %s40, %s43
      %p52 = scmp.eq.s32.totalorder %s35, 1
      %p53 = por %p51, %p52
      %p54 = scmp.ne.s32.totalorder %s43, %s44
      %p55 = scmp.eq.s32.totalorder %s35, 0
      %p56 = por %p54, %p55
      %p57 = scmp.ne.s32.totalorder %s43, %s44
      %p58 = scmp.eq.s32.totalorder %s36, 1
      %p59 = por %p57, %p58
      %p61 = scmp.ne.s32.totalorder %s44, %s60
      %p62 = scmp.eq.s32.totalorder %s36, 0
      %p63 = por %p61, %p62
      %s64 = ssub.s32 %s30, %s37
      %p65 = scmp.eq.s32.totalorder %s64, 0
      %s67 = sadd.s32 %s66, 1
      %s68 = scalar_select %p65, %s66, %s67
      %p71 = pneg %p65
      %p72 = scmp.eq.s32.totalorder %s30, 1
      %p73 = por %p71, %p72
      %p74 = scmp.ne.s32.totalorder %s66, %s69
      %p75 = scmp.eq.s32.totalorder %s30, 0
      %p76 = por %p74, %p75
      %p77 = scmp.ne.s32.totalorder %s66, %s69
      %p78 = scmp.eq.s32.totalorder %s35, 1
      %p79 = por %p77, %p78
      %p80 = scmp.ne.s32.totalorder %s69, %s70
      %p81 = scmp.eq.s32.totalorder %s35, 0
      %p82 = por %p80, %p81
      %p83 = scmp.ne.s32.totalorder %s69, %s70
      %p84 = scmp.eq.s32.totalorder %s36, 1
      %p85 = por %p83, %p84
      %p87 = scmp.ne.s32.totalorder %s70, %s86
      %p88 = scmp.eq.s32.totalorder %s36, 0
      %p89 = por %p87, %p88
      %s90 = ssub.s32 %s30, %s37
      %p91 = scmp.eq.s32.totalorder %s90, 0
      %s93 = sadd.s32 %s92, 1
      %s94 = scalar_select %p91, %s92, %s93
      %p97 = pneg %p91
      %p98 = scmp.eq.s32.totalorder %s30, 1
      %p99 = por %p97, %p98
      %p100 = scmp.ne.s32.totalorder %s92, %s95
      %p101 = scmp.eq.s32.totalorder %s30, 0
      %p102 = por %p100, %p101
      %p103 = scmp.ne.s32.totalorder %s92, %s95
      %p104 = scmp.eq.s32.totalorder %s35, 1
      %p105 = por %p103, %p104
      %p106 = scmp.ne.s32.totalorder %s95, %s96
      %p107 = scmp.eq.s32.totalorder %s35, 0
      %p108 = por %p106, %p107
      %p109 = scmp.ne.s32.totalorder %s95, %s96
      %p110 = scmp.eq.s32.totalorder %s36, 1
      %p111 = por %p109, %p110
      %p113 = scmp.ne.s32.totalorder %s96, %s112
      %p114 = scmp.eq.s32.totalorder %s36, 0
      %p115 = por %p113, %p114
      %s117 = sadd.s32 %s116, 1
      %p120 = scmp.eq.s32.totalorder %s30, 1
      %p121 = scmp.ne.s32.totalorder %s116, %s118
      %p122 = scmp.eq.s32.totalorder %s30, 0
      %p123 = por %p121, %p122
      %p124 = scmp.ne.s32.totalorder %s116, %s118
      %p125 = scmp.eq.s32.totalorder %s35, 1
      %p126 = por %p124, %p125
      %p127 = scmp.ne.s32.totalorder %s118, %s119
      %p128 = scmp.eq.s32.totalorder %s35, 0
      %p129 = por %p127, %p128
      %p130 = scmp.ne.s32.totalorder %s118, %s119
      %p131 = scmp.eq.s32.totalorder %s36, 1
      %p132 = por %p130, %p131
      %p134 = scmp.ne.s32.totalorder %s119, %s133
      %p135 = scmp.eq.s32.totalorder %s36, 0
      %p136 = por %p134, %p135
      %s138 = sadd.s32 %s137, 1
      %p141 = scmp.eq.s32.totalorder %s30, 1
      %p142 = scmp.ne.s32.totalorder %s137, %s139
      %p143 = scmp.eq.s32.totalorder %s30, 0
      %p144 = por %p142, %p143
      %p145 = scmp.ne.s32.totalorder %s137, %s139
      %p146 = scmp.eq.s32.totalorder %s35, 1
      %p147 = por %p145, %p146
      %p148 = scmp.ne.s32.totalorder %s139, %s140
      %p149 = scmp.eq.s32.totalorder %s35, 0
      %p150 = por %p148, %p149
      %p151 = scmp.ne.s32.totalorder %s139, %s140
      %p152 = scmp.eq.s32.totalorder %s36, 1
      %p153 = por %p151, %p152
      %p155 = scmp.ne.s32.totalorder %s140, %s154
      %p156 = scmp.eq.s32.totalorder %s36, 0
      %p157 = por %p155, %p156
      %s159 = sadd.s32 %s158, 1
      %p162 = scmp.eq.s32.totalorder %s30, 1
      %p163 = scmp.ne.s32.totalorder %s158, %s160
      %p164 = scmp.eq.s32.totalorder %s30, 0
      %p165 = por %p163, %p164
      %p166 = scmp.ne.s32.totalorder %s158, %s160
      %p167 = scmp.eq.s32.totalorder %s35, 1
      %p168 = por %p166, %p167
      %p169 = scmp.ne.s32.totalorder %s160, %s161
      %p170 = scmp.eq.s32.totalorder %s35, 0
      %p171 = por %p169, %p170
      %p172 = scmp.ne.s32.totalorder %s160, %s161
      %p173 = scmp.eq.s32.totalorder %s36, 1
      %p174 = por %p172, %p173
      %p176 = scmp.ne.s32.totalorder %s161, %s175
      %p177 = scmp.eq.s32.totalorder %s36, 0
      %p178 = por %p176, %p177
      %s180 = sadd.s32 %s179, 1
      %p183 = scmp.eq.s32.totalorder %s30, 1
      %p184 = scmp.ne.s32.totalorder %s179, %s181
      %p185 = scmp.eq.s32.totalorder %s30, 0
      %p186 = por %p184, %p185
      %p187 = scmp.ne.s32.totalorder %s179, %s181
      %p188 = scmp.eq.s32.totalorder %s35, 1
      %p189 = por %p187, %p188
      %p190 = scmp.ne.s32.totalorder %s181, %s182
      %p191 = scmp.eq.s32.totalorder %s35, 0
      %p192 = por %p190, %p191
      %p193 = scmp.ne.s32.totalorder %s181, %s182
      %p194 = scmp.eq.s32.totalorder %s36, 1
      %p195 = por %p193, %p194
      %p197 = scmp.ne.s32.totalorder %s182, %s196
      %p198 = scmp.eq.s32.totalorder %s36, 0
      %p199 = por %p197, %p198
      %s201 = sadd.s32 %s200, 1
      %p204 = scmp.eq.s32.totalorder %s30, 1
      %p205 = scmp.ne.s32.totalorder %s200, %s202
      %p206 = scmp.eq.s32.totalorder %s30, 0
      %p207 = por %p205, %p206
      %p208 = scmp.ne.s32.totalorder %s200, %s202
      %p209 = scmp.eq.s32.totalorder %s35, 1
      %p210 = por %p208, %p209
      %p211 = scmp.ne.s32.totalorder %s202, %s203
      %p212 = scmp.eq.s32.totalorder %s35, 0
      %p213 = por %p211, %p212
      %p214 = scmp.ne.s32.totalorder %s202, %s203
      %p215 = scmp.eq.s32.totalorder %s36, 1
      %p216 = por %p214, %p215
      %p218 = scmp.ne.s32.totalorder %s203, %s217
      %p219 = scmp.eq.s32.totalorder %s36, 0
      %p220 = por %p218, %p219
      %s222 = sadd.s32 %s221, 1
      %p225 = scmp.eq.s32.totalorder %s30, 1
      %p226 = scmp.ne.s32.totalorder %s221, %s223
      %p227 = scmp.eq.s32.totalorder %s30, 0
      %p228 = por %p226, %p227
      %p229 = scmp.ne.s32.totalorder %s221, %s223
      %p230 = scmp.eq.s32.totalorder %s35, 1
      %p231 = por %p229, %p230
      %p232 = scmp.ne.s32.totalorder %s223, %s224
      %p233 = scmp.eq.s32.totalorder %s35, 0
      %p234 = por %p232, %p233
      %p235 = scmp.ne.s32.totalorder %s223, %s224
      %p236 = scmp.eq.s32.totalorder %s36, 1
      %p237 = por %p235, %p236
      %p239 = scmp.ne.s32.totalorder %s224, %s238
      %p240 = scmp.eq.s32.totalorder %s36, 0
      %p241 = por %p239, %p240
      %s243 = sadd.s32 %s242, 1
      %p246 = scmp.eq.s32.totalorder %s30, 1
      %p247 = scmp.ne.s32.totalorder %s242, %s244
      %p248 = scmp.eq.s32.totalorder %s30, 0
      %p249 = por %p247, %p248
      %p250 = scmp.ne.s32.totalorder %s242, %s244
      %p251 = scmp.eq.s32.totalorder %s35, 1
      %p252 = por %p250, %p251
      %p253 = scmp.ne.s32.totalorder %s244, %s245
      %p254 = scmp.eq.s32.totalorder %s35, 0
      %p255 = por %p253, %p254
      %p256 = scmp.ne.s32.totalorder %s244, %s245
      %p257 = scmp.eq.s32.totalorder %s36, 1
      %p258 = por %p256, %p257
      %p260 = scmp.ne.s32.totalorder %s245, %s259
      %p261 = scmp.eq.s32.totalorder %s36, 0
      %p262 = por %p260, %p261
      %s264 = sadd.s32 %s263, 1
      %p267 = scmp.eq.s32.totalorder %s30, 1
      %p268 = scmp.ne.s32.totalorder %s263, %s265
      %p269 = scmp.eq.s32.totalorder %s30, 0
      %p270 = por %p268, %p269
      %p271 = scmp.ne.s32.totalorder %s263, %s265
      %p272 = scmp.eq.s32.totalorder %s35, 1
      %p273 = por %p271, %p272
      %p274 = scmp.ne.s32.totalorder %s265, %s266
      %p275 = scmp.eq.s32.totalorder %s35, 0
      %p276 = por %p274, %p275
      %p277 = scmp.ne.s32.totalorder %s265, %s266
      %p278 = scmp.eq.s32.totalorder %s36, 1
      %p279 = por %p277, %p278
      %p281 = scmp.ne.s32.totalorder %s266, %s280
      %p282 = scmp.eq.s32.totalorder %s36, 0
      %p283 = por %p281, %p282
      %s285 = sadd.s32 %s284, 1
      %p288 = scmp.eq.s32.totalorder %s30, 1
      %p289 = scmp.ne.s32.totalorder %s284, %s286
      %p290 = scmp.eq.s32.totalorder %s30, 0
      %p291 = por %p289, %p290
      %p292 = scmp.ne.s32.totalorder %s284, %s286
      %p293 = scmp.eq.s32.totalorder %s35, 1
      %p294 = por %p292, %p293
      %p295 = scmp.ne.s32.totalorder %s286, %s287
      %p296 = scmp.eq.s32.totalorder %s35, 0
      %p297 = por %p295, %p296
      %p298 = scmp.ne.s32.totalorder %s286, %s287
      %p299 = scmp.eq.s32.totalorder %s36, 1
      %p300 = por %p298, %p299
      %p302 = scmp.ne.s32.totalorder %s287, %s301
      %p303 = scmp.eq.s32.totalorder %s36, 0
      %p304 = por %p302, %p303
      %s306 = sadd.s32 %s305, 1
      %p309 = scmp.eq.s32.totalorder %s30, 1
      %p310 = scmp.ne.s32.totalorder %s305, %s307
      %p311 = scmp.eq.s32.totalorder %s30, 0
      %p312 = por %p310, %p311
      %p313 = scmp.ne.s32.totalorder %s305, %s307
      %p314 = scmp.eq.s32.totalorder %s35, 1
      %p315 = por %p313, %p314
      %p316 = scmp.ne.s32.totalorder %s307, %s308
      %p317 = scmp.eq.s32.totalorder %s35, 0
      %p318 = por %p316, %p317
      %p319 = scmp.ne.s32.totalorder %s307, %s308
      %p320 = scmp.eq.s32.totalorder %s36, 1
      %p321 = por %p319, %p320
      %p323 = scmp.ne.s32.totalorder %s308, %s322
      %p324 = scmp.eq.s32.totalorder %s36, 0
      %p325 = por %p323, %p324
      %s326 = ssub.s32 %s30, %s37
      %p327 = scmp.eq.s32.totalorder %s326, 0
      %s329 = sadd.s32 %s328, 1
      %s330 = scalar_select %p327, %s328, %s329
      %p333 = pneg %p327
      %p334 = scmp.eq.s32.totalorder %s30, 1
      %p335 = por %p333, %p334
      %p336 = scmp.ne.s32.totalorder %s328, %s331
      %p337 = scmp.eq.s32.totalorder %s30, 0
      %p338 = por %p336, %p337
      %p339 = scmp.ne.s32.totalorder %s328, %s331
      %p340 = scmp.eq.s32.totalorder %s35, 1
      %p341 = por %p339, %p340
      %p342 = scmp.ne.s32.totalorder %s331, %s332
      %p343 = scmp.eq.s32.totalorder %s35, 0
      %p344 = por %p342, %p343
      %p345 = scmp.ne.s32.totalorder %s331, %s332
      %p346 = scmp.eq.s32.totalorder %s36, 1
      %p347 = por %p345, %p346
      %p349 = scmp.ne.s32.totalorder %s332, %s348
      %p350 = scmp.eq.s32.totalorder %s36, 0
      %p351 = por %p349, %p350
      %p352 = scmp.le.s32.totalorder 1, %s30
      %p353 = scmp.lt.s32.totalorder %s30, 3
      %p354 = pnand %p352, %p353
      %p355 = pneg %p354
      // Predicated region
      $region9: #{tpu_custom_call.1} parent=5 // pred_check
        _
      $region10: #{tpu_custom_call.1} parent=5 // pred_check_branch
        %357 = sbr.rel (%p354) target = $region12
      $region11: #{tpu_custom_call.1} parent=5 // pred_region
        %s358 = ssub.s32 %s30, 1
        // Predicated region
        $region13: #{tpu_custom_call.1} parent=11 // pred_check
          %p359 = pneg %p129
        $region14: #{tpu_custom_call.1} parent=11 // pred_check_branch
          %361 = sbr.rel (%p359) target = $region16
        $region15: #{tpu_custom_call.1} parent=11 // pred_region
          %s363 = ssub.s32 512, 512
          %364 = vsyncadd [#allocation9], %s363
          %s365 = sshll.u32 [#allocation8], 4
          %s366 = int_to_ptr.vmem [resolvable:$true] %s365
          %371 = dma.hbm_to_vmem [thread:$0]  %s3, 512, %s366, [#allocation9], 128, 128, 8
        $region16: #{tpu_custom_call.1} parent=11 // pred_fallthru
          _
        // Predicated region
        $region17: #{tpu_custom_call.1} parent=11 // pred_check
          %p372 = pneg %p150
        $region18: #{tpu_custom_call.1} parent=11 // pred_check_branch
          %374 = sbr.rel (%p372) target = $region20
        $region19: #{tpu_custom_call.1} parent=11 // pred_region
          %s376 = ssub.s32 512, 512
          %377 = vsyncadd [#allocation9], %s376
          %s378 = sshll.u32 [#allocation10], 4
          %s379 = int_to_ptr.vmem [resolvable:$true] %s378
          %384 = dma.hbm_to_vmem [thread:$0]  %s4, 512, %s379, [#allocation9], 128, 128, 8
        $region20: #{tpu_custom_call.1} parent=11 // pred_fallthru
          _
        // Predicated region
        $region21: #{tpu_custom_call.1} parent=11 // pred_check
          %p385 = pneg %p171
        $region22: #{tpu_custom_call.1} parent=11 // pred_check_branch
          %387 = sbr.rel (%p385) target = $region24
        $region23: #{tpu_custom_call.1} parent=11 // pred_region
          %s389 = ssub.s32 512, 512
          %390 = vsyncadd [#allocation12], %s389
          %s391 = sshll.u32 [#allocation11], 4
          %s392 = int_to_ptr.vmem [resolvable:$true] %s391
          %397 = dma.hbm_to_vmem [thread:$0]  %s5, 512, %s392, [#allocation12], 128, 128, 8
        $region24: #{tpu_custom_call.1} parent=11 // pred_fallthru
          _
        // Predicated region
        $region25: #{tpu_custom_call.1} parent=11 // pred_check
          %p398 = pneg %p192
        $region26: #{tpu_custom_call.1} parent=11 // pred_check_branch
          %400 = sbr.rel (%p398) target = $region28
        $region27: #{tpu_custom_call.1} parent=11 // pred_region
          %s402 = ssub.s32 512, 512
          %403 = vsyncadd [#allocation12], %s402
          %s404 = sshll.u32 [#allocation13], 4
          %s405 = int_to_ptr.vmem [resolvable:$true] %s404
          %410 = dma.hbm_to_vmem [thread:$0]  %s6, 512, %s405, [#allocation12], 128, 128, 8
        $region28: #{tpu_custom_call.1} parent=11 // pred_fallthru
          _
        // Predicated region
        $region29: #{tpu_custom_call.1} parent=11 // pred_check
          %p411 = pneg %p213
        $region30: #{tpu_custom_call.1} parent=11 // pred_check_branch
          %413 = sbr.rel (%p411) target = $region32
        $region31: #{tpu_custom_call.1} parent=11 // pred_region
          _
        $region32: #{tpu_custom_call.1} parent=11 // pred_fallthru
          _
        // Predicated region
        $region33: #{tpu_custom_call.1} parent=11 // pred_check
          %p414 = pneg %p234
        $region34: #{tpu_custom_call.1} parent=11 // pred_check_branch
          %416 = sbr.rel (%p414) target = $region36
        $region35: #{tpu_custom_call.1} parent=11 // pred_region
          _
        $region36: #{tpu_custom_call.1} parent=11 // pred_fallthru
          _
        // Predicated region
        $region37: #{tpu_custom_call.1} parent=11 // pred_check
          %p417 = pneg %p255
        $region38: #{tpu_custom_call.1} parent=11 // pred_check_branch
          %419 = sbr.rel (%p417) target = $region40
        $region39: #{tpu_custom_call.1} parent=11 // pred_region
          _
        $region40: #{tpu_custom_call.1} parent=11 // pred_fallthru
          _
        // Predicated region
        $region41: #{tpu_custom_call.1} parent=11 // pred_check
          %p420 = pneg %p276
        $region42: #{tpu_custom_call.1} parent=11 // pred_check_branch
          %422 = sbr.rel (%p420) target = $region44
        $region43: #{tpu_custom_call.1} parent=11 // pred_region
          _
        $region44: #{tpu_custom_call.1} parent=11 // pred_fallthru
          _
        // Predicated region
        $region45: #{tpu_custom_call.1} parent=11 // pred_check
          %p423 = pneg %p297
        $region46: #{tpu_custom_call.1} parent=11 // pred_check_branch
          %425 = sbr.rel (%p423) target = $region48
        $region47: #{tpu_custom_call.1} parent=11 // pred_region
          _
        $region48: #{tpu_custom_call.1} parent=11 // pred_fallthru
          _
        // Predicated region
        $region49: #{tpu_custom_call.1} parent=11 // pred_check
          %p426 = pneg %p318
        $region50: #{tpu_custom_call.1} parent=11 // pred_check_branch
          %428 = sbr.rel (%p426) target = $region52
        $region51: #{tpu_custom_call.1} parent=11 // pred_region
          _
        $region52: #{tpu_custom_call.1} parent=11 // pred_fallthru
          _
      $region12: #{tpu_custom_call.1} parent=5 // pred_fallthru
        _
      %p429 = scmp.lt.s32.totalorder %s30, 2
      // Predicated region
      $region53: #{tpu_custom_call.1} parent=5 // pred_check
        %p430 = pneg %p429
      $region54: #{tpu_custom_call.1} parent=5 // pred_check_branch
        %432 = sbr.rel (%p430) target = $region56
      $region55: #{tpu_custom_call.1} parent=5 // pred_region
        // Predicated region
        $region57: #{tpu_custom_call.1} parent=55 // pred_check
          %p433 = pneg %p50
        $region58: #{tpu_custom_call.1} parent=55 // pred_check_branch
          %435 = sbr.rel (%p433) target = $region60
        $region59: #{tpu_custom_call.1} parent=55 // pred_region
          %s436 = sand.u32 %s40, 1
          %s437 = scalar_lea.sflag [#allocation3], %s436
          %s438 = sand.u32 %s40, 1
          %s439 = smul.addr %s438, 8
          %s440 = scalar_lea.vmem [#allocation2], %s439
          %s442 = ssub.s32 128, 128
          %443 = vsyncadd %s437, %s442
          %s444 = smul.addr %s30, 128
          %s445 = scalar_lea.hbm %s0, %s444
          %s447 = sshll.u32 %s440, 4
          %s448 = int_to_ptr.vmem [resolvable:$true] %s447
          %450 = dma.hbm_to_vmem [thread:$0]  %s445, 128, %s448, %s437
        $region60: #{tpu_custom_call.1} parent=55 // pred_fallthru
          _
        // Predicated region
        $region61: #{tpu_custom_call.1} parent=55 // pred_check
          %p451 = pneg %p76
        $region62: #{tpu_custom_call.1} parent=55 // pred_check_branch
          %453 = sbr.rel (%p451) target = $region64
        $region63: #{tpu_custom_call.1} parent=55 // pred_region
          %s454 = sand.u32 %s30, 1
          %s455 = scalar_lea.sflag [#allocation6], %s454
          %s456 = sand.u32 %s66, 1
          %s457 = smul.addr %s456, 8
          %s458 = scalar_lea.vmem [#allocation5], %s457
          %s460 = ssub.s32 128, 128
          %461 = vsyncadd %s455, %s460
          %s462 = smul.addr %s30, 128
          %s463 = scalar_lea.hbm %s1, %s462
          %s465 = sshll.u32 %s458, 4
          %s466 = int_to_ptr.vmem [resolvable:$true] %s465
          %468 = dma.hbm_to_vmem [thread:$0]  %s463, 128, %s466, %s455
        $region64: #{tpu_custom_call.1} parent=55 // pred_fallthru
          _
        // Predicated region
        $region65: #{tpu_custom_call.1} parent=55 // pred_check
          %p469 = pneg %p102
        $region66: #{tpu_custom_call.1} parent=55 // pred_check_branch
          %471 = sbr.rel (%p469) target = $region68
        $region67: #{tpu_custom_call.1} parent=55 // pred_region
          %s472 = sand.u32 %s30, 1
          %s473 = scalar_lea.sflag [#allocation6], %s472
          %s474 = sand.u32 %s92, 1
          %s475 = smul.addr %s474, 8
          %s476 = scalar_lea.vmem [#allocation7], %s475
          %s478 = ssub.s32 128, 128
          %479 = vsyncadd %s473, %s478
          %s480 = smul.addr %s30, 128
          %s481 = scalar_lea.hbm %s2, %s480
          %s483 = sshll.u32 %s476, 4
          %s484 = int_to_ptr.vmem [resolvable:$true] %s483
          %486 = dma.hbm_to_vmem [thread:$0]  %s481, 128, %s484, %s473
        $region68: #{tpu_custom_call.1} parent=55 // pred_fallthru
          _
      $region56: #{tpu_custom_call.1} parent=5 // pred_fallthru
        _
      %p487 = scmp.le.s32.totalorder 1, %s30
      %p488 = scmp.lt.s32.totalorder %s30, 3
      %p489 = pnand %p487, %p488
      %p490 = pneg %p489
      // Predicated region
      $region69: #{tpu_custom_call.1} parent=5 // pred_check
        _
      $region70: #{tpu_custom_call.1} parent=5 // pred_check_branch
        %492 = sbr.rel (%p489) target = $region72
      $region71: #{tpu_custom_call.1} parent=5 // pred_region
        %s493 = ssub.s32 %s30, 1
        %s494 = sand.u32 %s43, 1
        %s495 = scalar_lea.sflag [#allocation3], %s494
        %s496 = sand.u32 %s43, 1
        %s497 = smul.addr %s496, 8
        %s498 = scalar_lea.vmem [#allocation2], %s497
        // Predicated region
        $region73: #{tpu_custom_call.1} parent=71 // pred_check
          %p499 = pneg %p56
        $region74: #{tpu_custom_call.1} parent=71 // pred_check_branch
          %501 = sbr.rel (%p499) target = $region76
        $region75: #{tpu_custom_call.1} parent=71 // pred_region
          %502 = dma.done %s495, 128
        $region76: #{tpu_custom_call.1} parent=71 // pred_fallthru
          _
        %s503 = sand.u32 %s35, 1
        %s504 = scalar_lea.sflag [#allocation6], %s503
        %s505 = sand.u32 %s69, 1
        %s506 = smul.addr %s505, 8
        %s507 = scalar_lea.vmem [#allocation5], %s506
        // Predicated region
        $region77: #{tpu_custom_call.1} parent=71 // pred_check
          %p508 = pneg %p82
        $region78: #{tpu_custom_call.1} parent=71 // pred_check_branch
          %510 = sbr.rel (%p508) target = $region80
        $region79: #{tpu_custom_call.1} parent=71 // pred_region
          %511 = dma.done %s504, 128
        $region80: #{tpu_custom_call.1} parent=71 // pred_fallthru
          _
        %s512 = sand.u32 %s35, 1
        %s513 = scalar_lea.sflag [#allocation6], %s512
        %s514 = sand.u32 %s95, 1
        %s515 = smul.addr %s514, 8
        %s516 = scalar_lea.vmem [#allocation7], %s515
        // Predicated region
        $region81: #{tpu_custom_call.1} parent=71 // pred_check
          %p517 = pneg %p108
        $region82: #{tpu_custom_call.1} parent=71 // pred_check_branch
          %519 = sbr.rel (%p517) target = $region84
        $region83: #{tpu_custom_call.1} parent=71 // pred_region
          %520 = dma.done %s513, 128
        $region84: #{tpu_custom_call.1} parent=71 // pred_fallthru
          _
        // Predicated region
        $region85: #{tpu_custom_call.1} parent=71 // pred_check
          %p521 = pneg %p129
        $region86: #{tpu_custom_call.1} parent=71 // pred_check_branch
          %523 = sbr.rel (%p521) target = $region88
        $region87: #{tpu_custom_call.1} parent=71 // pred_region
          %524 = dma.done [#allocation9], 512
        $region88: #{tpu_custom_call.1} parent=71 // pred_fallthru
          _
        // Predicated region
        $region89: #{tpu_custom_call.1} parent=71 // pred_check
          %p525 = pneg %p150
        $region90: #{tpu_custom_call.1} parent=71 // pred_check_branch
          %527 = sbr.rel (%p525) target = $region92
        $region91: #{tpu_custom_call.1} parent=71 // pred_region
          %528 = dma.done [#allocation9], 512
        $region92: #{tpu_custom_call.1} parent=71 // pred_fallthru
          _
        // Predicated region
        $region93: #{tpu_custom_call.1} parent=71 // pred_check
          %p529 = pneg %p171
        $region94: #{tpu_custom_call.1} parent=71 // pred_check_branch
          %531 = sbr.rel (%p529) target = $region96
        $region95: #{tpu_custom_call.1} parent=71 // pred_region
          %532 = dma.done [#allocation12], 512
        $region96: #{tpu_custom_call.1} parent=71 // pred_fallthru
          _
        // Predicated region
        $region97: #{tpu_custom_call.1} parent=71 // pred_check
          %p533 = pneg %p192
        $region98: #{tpu_custom_call.1} parent=71 // pred_check_branch
          %535 = sbr.rel (%p533) target = $region100
        $region99: #{tpu_custom_call.1} parent=71 // pred_region
          %536 = dma.done [#allocation12], 512
        $region100: #{tpu_custom_call.1} parent=71 // pred_fallthru
          _
        %s537 = sand.u32 %s43, 1
        %s538 = scalar_lea.sflag [#allocation3], %s537
        %s539 = sand.u32 %s43, 1
        %s540 = smul.addr %s539, 8
        %s541 = scalar_lea.vmem [#allocation2], %s540
        %p542 = pneg %p56
        %p543 = pneg %p53
        %s544 = sand.u32 %s35, 1
        %s545 = scalar_lea.sflag [#allocation6], %s544
        %s546 = sand.u32 %s69, 1
        %s547 = smul.addr %s546, 8
        %s548 = scalar_lea.vmem [#allocation5], %s547
        %p549 = pneg %p82
        %p550 = pneg %p79
        %s551 = sand.u32 %s35, 1
        %s552 = scalar_lea.sflag [#allocation6], %s551
        %s553 = sand.u32 %s95, 1
        %s554 = smul.addr %s553, 8
        %s555 = scalar_lea.vmem [#allocation7], %s554
        %p556 = pneg %p108
        %p557 = pneg %p105
        %p558 = pneg %p129
        %p559 = pneg %p126
        %p560 = pneg %p150
        %p561 = pneg %p147
        %p562 = pneg %p171
        %p563 = pneg %p168
        %p564 = pneg %p192
        %p565 = pneg %p189
        %p566 = pneg %p213
        %p567 = pneg %p210
        %p568 = pneg %p234
        %p569 = pneg %p231
        %p570 = pneg %p255
        %p571 = pneg %p252
        %p572 = pneg %p276
        %p573 = pneg %p273
        %p574 = pneg %p297
        %p575 = pneg %p294
        %p576 = pneg %p318
        %p577 = pneg %p315
        %p578 = pneg %p344
        %p579 = pneg %p341
        %s580 = sand.u32 %s331, 1
        %s581 = scalar_lea.sflag [#allocation4], %s580
        %s582 = sand.u32 %s331, 1
        %s583 = smul.addr %s582, 8
        %s584 = scalar_lea.vmem [#allocation14], %s583
        %v585 = vld [vmem:[%s498] sm:$0xff]
        %v586 = vld [vmem:[%s507] sm:$0xff]
        %v587 = vld [vmem:[%s516] sm:$0xff]
        %v588 = vld [vmem:[%s11] sm:$0x1]
        %v589 = vld [vmem:[%s12] sm:$0x1]
        %v590 = vadd.f32 %v585, %v586
        %v591 = vld [vmem:[#allocation8] sm:$0xff]
        %v592 = vld [vmem:[#allocation8 + $0x8] sm:$0xff]
        %v593 = vld [vmem:[#allocation8 + $0x10] sm:$0xff]
        %v594 = vld [vmem:[#allocation8 + $0x18] sm:$0xff]
        %v595 = vld [vmem:[%s7] sm:$0x1]
        %v597 = vlaneseq
        %v598 = vshrl.u32 %v597, 7
        %v599 = vsub.s32 0, %v598
        %v600 = vrot.slane %v595, %v599
        %vm602 = vcmask 261120
        %v604 = vsel %vm602, %v590, 0
        %606 = vmatprep.subr.mxu0 0.0
        %607 = vmatpush1.msra.mxu0 %v591
        %608 = vmatprep.subr.mxu0 0.0
        %609 = vmatpush1.msra.mxu0 %v592
        %610 = vmatprep.subr.mxu0 0.0
        %611 = vmatpush1.msra.mxu0 %v593
        %612 = vmatprep.subr.mxu0 0.0
        %613 = vmatpush1.msra.mxu0 %v594
        %614 = vmatprep.subr.mxu0 0.0
        %615 = vmatpush1.msra.mxu0 0.0
        %616 = vmatprep.subr.mxu0 0.0
        %617 = vmatpush1.msra.mxu0 0.0
        %618 = vmatprep.subr.mxu0 0.0
        %619 = vmatpush1.msra.mxu0 0.0
        %620 = vmatprep.subr.mxu0 0.0
        %621 = vmatpush1.msra.mxu0 0.0
        %622 = vmatprep.subr.mxu0 0.0
        %623 = vmatpush1.msra.mxu0 0.0
        %624 = vmatprep.subr.mxu0 0.0
        %625 = vmatpush1.msra.mxu0 0.0
        %626 = vmatprep.subr.mxu0 0.0
        %627 = vmatpush1.msra.mxu0 0.0
        %628 = vmatprep.subr.mxu0 0.0
        %629 = vmatpush1.msra.mxu0 0.0
        %630 = vmatprep.subr.mxu0 0.0
        %631 = vmatpush1.msra.mxu0 0.0
        %632 = vmatprep.subr.mxu0 0.0
        %633 = vmatpush1.msra.mxu0 0.0
        %634 = vmatprep.subr.mxu0 0.0
        %635 = vmatpush1.msra.mxu0 0.0
        %636 = vmatprep.subr.mxu0 0.0
        %637 = vmatpush1.msra.mxu0 0.0
        %638 = vmatprep.subr.mxu0 0.0
        %639 = vmatpush1.msra.mxu0 0.0
        %640 = vmatprep.subr.mxu0 0.0
        %641 = vmatpush1.msra.mxu0 0.0
        %642 = vmatprep.subr.mxu0 0.0
        %643 = vmatpush1.msra.mxu0 0.0
        %644 = vmatprep.subr.mxu0 0.0
        %645 = vmatpush1.msra.mxu0 0.0
        %646 = vmatprep.subr.mxu0 0.0
        %647 = vmatpush1.msra.mxu0 0.0
        %648 = vmatprep.subr.mxu0 0.0
        %649 = vmatpush1.msra.mxu0 0.0
        %650 = vmatprep.subr.mxu0 0.0
        %651 = vmatpush1.msra.mxu0 0.0
        %652 = vmatprep.subr.mxu0 0.0
        %653 = vmatpush1.msra.mxu0 0.0
        %654 = vmatprep.subr.mxu0 0.0
        %655 = vmatpush1.msra.mxu0 0.0
        %656 = vmatprep.subr.mxu0 0.0
        %657 = vmatpush1.msra.mxu0 0.0
        %658 = vmatprep.subr.mxu0 0.0
        %659 = vmatpush1.msra.mxu0 0.0
        %660 = vmatprep.subr.mxu0 0.0
        %661 = vmatpush1.msra.mxu0 0.0
        %662 = vmatprep.subr.mxu0 0.0
        %663 = vmatpush1.msra.mxu0 0.0
        %664 = vmatprep.subr.mxu0 0.0
        %665 = vmatpush1.msra.mxu0 0.0
        %666 = vmatprep.subr.mxu0 0.0
        %667 = vmatpush1.msra.mxu0 0.0
        %668 = vmatprep.subr.mxu0 0.0
        %669 = vmatpush1.msra.mxu0 0.0
        %670 = vmatprep.mubr.f32.mxu0 0.0
        %671 = vmatmul.mubr.f32.gmra.mrb[0].mxu0 %v604
        %v672 = vpop.f32.mrb[0].mxu0
        %v673 = vadd.f32 %v600, %v672
        %v674 = vpop.f32.mrb[0].mxu0
        %675 = vdwg.mxu0
        %v676 = vld [vmem:[#allocation10] sm:$0xff]
        %v677 = vld [vmem:[#allocation10 + $0x8] sm:$0xff]
        %v678 = vld [vmem:[#allocation10 + $0x10] sm:$0xff]
        %v679 = vld [vmem:[#allocation10 + $0x18] sm:$0xff]
        %v680 = vld [vmem:[%s8] sm:$0x1]
        %v682 = vlaneseq
        %v683 = vshrl.u32 %v682, 7
        %v684 = vsub.s32 0, %v683
        %v685 = vrot.slane %v680, %v684
        %687 = vmatprep.subr.mxu0 0.0
        %688 = vmatpush1.msra.mxu0 %v676
        %689 = vmatprep.subr.mxu0 0.0
        %690 = vmatpush1.msra.mxu0 %v677
        %691 = vmatprep.subr.mxu0 0.0
        %692 = vmatpush1.msra.mxu0 %v678
        %693 = vmatprep.subr.mxu0 0.0
        %694 = vmatpush1.msra.mxu0 %v679
        %695 = vmatprep.subr.mxu0 0.0
        %696 = vmatpush1.msra.mxu0 0.0
        %697 = vmatprep.subr.mxu0 0.0
        %698 = vmatpush1.msra.mxu0 0.0
        %699 = vmatprep.subr.mxu0 0.0
        %700 = vmatpush1.msra.mxu0 0.0
        %701 = vmatprep.subr.mxu0 0.0
        %702 = vmatpush1.msra.mxu0 0.0
        %703 = vmatprep.subr.mxu0 0.0
        %704 = vmatpush1.msra.mxu0 0.0
        %705 = vmatprep.subr.mxu0 0.0
        %706 = vmatpush1.msra.mxu0 0.0
        %707 = vmatprep.subr.mxu0 0.0
        %708 = vmatpush1.msra.mxu0 0.0
        %709 = vmatprep.subr.mxu0 0.0
        %710 = vmatpush1.msra.mxu0 0.0
        %711 = vmatprep.subr.mxu0 0.0
        %712 = vmatpush1.msra.mxu0 0.0
        %713 = vmatprep.subr.mxu0 0.0
        %714 = vmatpush1.msra.mxu0 0.0
        %715 = vmatprep.subr.mxu0 0.0
        %716 = vmatpush1.msra.mxu0 0.0
        %717 = vmatprep.subr.mxu0 0.0
        %718 = vmatpush1.msra.mxu0 0.0
        %719 = vmatprep.subr.mxu0 0.0
        %720 = vmatpush1.msra.mxu0 0.0
        %721 = vmatprep.subr.mxu0 0.0
        %722 = vmatpush1.msra.mxu0 0.0
        %723 = vmatprep.subr.mxu0 0.0
        %724 = vmatpush1.msra.mxu0 0.0
        %725 = vmatprep.subr.mxu0 0.0
        %726 = vmatpush1.msra.mxu0 0.0
        %727 = vmatprep.subr.mxu0 0.0
        %728 = vmatpush1.msra.mxu0 0.0
        %729 = vmatprep.subr.mxu0 0.0
        %730 = vmatpush1.msra.mxu0 0.0
        %731 = vmatprep.subr.mxu0 0.0
        %732 = vmatpush1.msra.mxu0 0.0
        %733 = vmatprep.subr.mxu0 0.0
        %734 = vmatpush1.msra.mxu0 0.0
        %735 = vmatprep.subr.mxu0 0.0
        %736 = vmatpush1.msra.mxu0 0.0
        %737 = vmatprep.subr.mxu0 0.0
        %738 = vmatpush1.msra.mxu0 0.0
        %739 = vmatprep.subr.mxu0 0.0
        %740 = vmatpush1.msra.mxu0 0.0
        %741 = vmatprep.subr.mxu0 0.0
        %742 = vmatpush1.msra.mxu0 0.0
        %743 = vmatprep.subr.mxu0 0.0
        %744 = vmatpush1.msra.mxu0 0.0
        %745 = vmatprep.subr.mxu0 0.0
        %746 = vmatpush1.msra.mxu0 0.0
        %747 = vmatprep.subr.mxu0 0.0
        %748 = vmatpush1.msra.mxu0 0.0
        %749 = vmatprep.subr.mxu0 0.0
        %750 = vmatpush1.msra.mxu0 0.0
        %751 = vmatprep.mubr.f32.mxu0 0.0
        %752 = vmatmul.mubr.f32.gmra.mrb[0].mxu0 %v604
        %v753 = vpop.f32.mrb[0].mxu0
        %v754 = vadd.f32 %v685, %v753
        %v755 = vpop.f32.mrb[0].mxu0
        %756 = vdwg.mxu0
        %v757 = vld [vmem:[#allocation11] sm:$0xff]
        %v758 = vld [vmem:[#allocation11 + $0x8] sm:$0xff]
        %v759 = vld [vmem:[#allocation11 + $0x10] sm:$0xff]
        %v760 = vld [vmem:[#allocation11 + $0x18] sm:$0xff]
        %v761 = vld [vmem:[%s9] sm:$0x1]
        %v763 = vlaneseq
        %v764 = vshrl.u32 %v763, 7
        %v765 = vsub.s32 0, %v764
        %v766 = vrot.slane %v761, %v765
        %v769 = vsel %vm602, %v585, 0
        %771 = vmatprep.subr.mxu0 0.0
        %772 = vmatpush1.msra.mxu0 %v757
        %773 = vmatprep.subr.mxu0 0.0
        %774 = vmatpush1.msra.mxu0 %v758
        %775 = vmatprep.subr.mxu0 0.0
        %776 = vmatpush1.msra.mxu0 %v759
        %777 = vmatprep.subr.mxu0 0.0
        %778 = vmatpush1.msra.mxu0 %v760
        %779 = vmatprep.subr.mxu0 0.0
        %780 = vmatpush1.msra.mxu0 0.0
        %781 = vmatprep.subr.mxu0 0.0
        %782 = vmatpush1.msra.mxu0 0.0
        %783 = vmatprep.subr.mxu0 0.0
        %784 = vmatpush1.msra.mxu0 0.0
        %785 = vmatprep.subr.mxu0 0.0
        %786 = vmatpush1.msra.mxu0 0.0
        %787 = vmatprep.subr.mxu0 0.0
        %788 = vmatpush1.msra.mxu0 0.0
        %789 = vmatprep.subr.mxu0 0.0
        %790 = vmatpush1.msra.mxu0 0.0
        %791 = vmatprep.subr.mxu0 0.0
        %792 = vmatpush1.msra.mxu0 0.0
        %793 = vmatprep.subr.mxu0 0.0
        %794 = vmatpush1.msra.mxu0 0.0
        %795 = vmatprep.subr.mxu0 0.0
        %796 = vmatpush1.msra.mxu0 0.0
        %797 = vmatprep.subr.mxu0 0.0
        %798 = vmatpush1.msra.mxu0 0.0
        %799 = vmatprep.subr.mxu0 0.0
        %800 = vmatpush1.msra.mxu0 0.0
        %801 = vmatprep.subr.mxu0 0.0
        %802 = vmatpush1.msra.mxu0 0.0
        %803 = vmatprep.subr.mxu0 0.0
        %804 = vmatpush1.msra.mxu0 0.0
        %805 = vmatprep.subr.mxu0 0.0
        %806 = vmatpush1.msra.mxu0 0.0
        %807 = vmatprep.subr.mxu0 0.0
        %808 = vmatpush1.msra.mxu0 0.0
        %809 = vmatprep.subr.mxu0 0.0
        %810 = vmatpush1.msra.mxu0 0.0
        %811 = vmatprep.subr.mxu0 0.0
        %812 = vmatpush1.msra.mxu0 0.0
        %813 = vmatprep.subr.mxu0 0.0
        %814 = vmatpush1.msra.mxu0 0.0
        %815 = vmatprep.subr.mxu0 0.0
        %816 = vmatpush1.msra.mxu0 0.0
        %817 = vmatprep.subr.mxu0 0.0
        %818 = vmatpush1.msra.mxu0 0.0
        %819 = vmatprep.subr.mxu0 0.0
        %820 = vmatpush1.msra.mxu0 0.0
        %821 = vmatprep.subr.mxu0 0.0
        %822 = vmatpush1.msra.mxu0 0.0
        %823 = vmatprep.subr.mxu0 0.0
        %824 = vmatpush1.msra.mxu0 0.0
        %825 = vmatprep.subr.mxu0 0.0
        %826 = vmatpush1.msra.mxu0 0.0
        %827 = vmatprep.subr.mxu0 0.0
        %828 = vmatpush1.msra.mxu0 0.0
        %829 = vmatprep.subr.mxu0 0.0
        %830 = vmatpush1.msra.mxu0 0.0
        %831 = vmatprep.subr.mxu0 0.0
        %832 = vmatpush1.msra.mxu0 0.0
        %833 = vmatprep.subr.mxu0 0.0
        %834 = vmatpush1.msra.mxu0 0.0
        %835 = vmatprep.mubr.f32.mxu0 0.0
        %836 = vmatmul.mubr.f32.gmra.mrb[0].mxu0 %v769
        %v837 = vpop.f32.mrb[0].mxu0
        %v838 = vadd.f32 %v766, %v837
        %v839 = vpop.f32.mrb[0].mxu0
        %840 = vdwg.mxu0
        %v841 = vld [vmem:[#allocation13] sm:$0xff]
        %v842 = vld [vmem:[#allocation13 + $0x8] sm:$0xff]
        %v843 = vld [vmem:[#allocation13 + $0x10] sm:$0xff]
        %v844 = vld [vmem:[#allocation13 + $0x18] sm:$0xff]
        %vm845 = vcmask 64512
        %v847 = vsel %vm845, %v673, 0
        %v850 = vsel %vm845, %v754, 0
        %852 = vmatprep.subr.mxu0 0.0
        %853 = vmatpush1.xpose.msra.mxu0 %v850
        %854 = vmatprep.subr.mxu0 0.0
        %855 = vmatpush1.xpose.msra.mxu0 0.0
        %856 = vmatprep.subr.mxu0 0.0
        %857 = vmatpush1.xpose.msra.mxu0 0.0
        %858 = vmatprep.subr.mxu0 0.0
        %859 = vmatpush1.xpose.msra.mxu0 0.0
        %860 = vmatprep.subr.mxu0 0.0
        %861 = vmatpush1.xpose.msra.mxu0 0.0
        %862 = vmatprep.subr.mxu0 0.0
        %863 = vmatpush1.xpose.msra.mxu0 0.0
        %864 = vmatprep.subr.mxu0 0.0
        %865 = vmatpush1.xpose.msra.mxu0 0.0
        %866 = vmatprep.subr.mxu0 0.0
        %867 = vmatpush1.xpose.msra.mxu0 0.0
        %868 = vmatprep.subr.mxu0 0.0
        %869 = vmatpush1.xpose.msra.mxu0 0.0
        %870 = vmatprep.subr.mxu0 0.0
        %871 = vmatpush1.xpose.msra.mxu0 0.0
        %872 = vmatprep.subr.mxu0 0.0
        %873 = vmatpush1.xpose.msra.mxu0 0.0
        %874 = vmatprep.subr.mxu0 0.0
        %875 = vmatpush1.xpose.msra.mxu0 0.0
        %876 = vmatprep.subr.mxu0 0.0
        %877 = vmatpush1.xpose.msra.mxu0 0.0
        %878 = vmatprep.subr.mxu0 0.0
        %879 = vmatpush1.xpose.msra.mxu0 0.0
        %880 = vmatprep.subr.mxu0 0.0
        %881 = vmatpush1.xpose.msra.mxu0 0.0
        %882 = vmatprep.subr.mxu0 0.0
        %883 = vmatpush1.xpose.msra.mxu0 0.0
        %884 = vmatprep.subr.mxu0 0.0
        %885 = vmatpush1.xpose.msra.mxu0 0.0
        %886 = vmatprep.subr.mxu0 0.0
        %887 = vmatpush1.xpose.msra.mxu0 0.0
        %888 = vmatprep.subr.mxu0 0.0
        %889 = vmatpush1.xpose.msra.mxu0 0.0
        %890 = vmatprep.subr.mxu0 0.0
        %891 = vmatpush1.xpose.msra.mxu0 0.0
        %892 = vmatprep.subr.mxu0 0.0
        %893 = vmatpush1.xpose.msra.mxu0 0.0
        %894 = vmatprep.subr.mxu0 0.0
        %895 = vmatpush1.xpose.msra.mxu0 0.0
        %896 = vmatprep.subr.mxu0 0.0
        %897 = vmatpush1.xpose.msra.mxu0 0.0
        %898 = vmatprep.subr.mxu0 0.0
        %899 = vmatpush1.xpose.msra.mxu0 0.0
        %900 = vmatprep.subr.mxu0 0.0
        %901 = vmatpush1.xpose.msra.mxu0 0.0
        %902 = vmatprep.subr.mxu0 0.0
        %903 = vmatpush1.xpose.msra.mxu0 0.0
        %904 = vmatprep.subr.mxu0 0.0
        %905 = vmatpush1.xpose.msra.mxu0 0.0
        %906 = vmatprep.subr.mxu0 0.0
        %907 = vmatpush1.xpose.msra.mxu0 0.0
        %908 = vmatprep.subr.mxu0 0.0
        %909 = vmatpush1.xpose.msra.mxu0 0.0
        %910 = vmatprep.subr.mxu0 0.0
        %911 = vmatpush1.xpose.msra.mxu0 0.0
        %912 = vmatprep.subr.mxu0 0.0
        %913 = vmatpush1.xpose.msra.mxu0 0.0
        %914 = vmatprep.subr.mxu0 0.0
        %915 = vmatpush1.xpose.msra.mxu0 0.0
        %916 = vmatprep.mubr.f32.mxu0 0.0
        %917 = vmatmul.mubr.f32.gmra.mrb[0].mxu0 %v847
        %v918 = vpop.f32.mrb[0].mxu0
        %v919 = vadd.f32 0.0, %v918
        %v920 = vpop.f32.mrb[0].mxu0
        %921 = vdwg.mxu0
        %v922 = vmul.f32 %v919, 0.35355338
        %v923 = vadd.f32 %v922, %v587
        %v924 = vsel %vm845, %v923, -inf
        %925 = vmax.xlane.f32.xlu0 %v924
        %v926 = vpop.xlane.xlu0 %925
        %v927 = vsub.f32 %v923, %v926
        %v928 = vmul.f32 %v927, 1.442695
        %v929 = vpow.pop %v928
        %v930 = vsel %vm845, %v929, 0.0
        %931 = vadd.xlane.f32.xlu0 %v930
        %v932 = vpop.xlane.xlu0 %931
        %v933 = vrcp.pop %v932
        %v934 = vmul.f32 %v929, %v933
        %v936 = vsel %vm845, %v934, 0
        %938 = vmatprep.subr.mxu0 0.0
        %939 = vmatpush1.msra.mxu0 %v838
        %940 = vmatprep.subr.mxu0 0.0
        %941 = vmatpush1.msra.mxu0 0.0
        %942 = vmatprep.subr.mxu0 0.0
        %943 = vmatpush1.msra.mxu0 0.0
        %944 = vmatprep.subr.mxu0 0.0
        %945 = vmatpush1.msra.mxu0 0.0
        %946 = vmatprep.subr.mxu0 0.0
        %947 = vmatpush1.msra.mxu0 0.0
        %948 = vmatprep.subr.mxu0 0.0
        %949 = vmatpush1.msra.mxu0 0.0
        %950 = vmatprep.subr.mxu0 0.0
        %951 = vmatpush1.msra.mxu0 0.0
        %952 = vmatprep.subr.mxu0 0.0
        %953 = vmatpush1.msra.mxu0 0.0
        %954 = vmatprep.subr.mxu0 0.0
        %955 = vmatpush1.msra.mxu0 0.0
        %956 = vmatprep.subr.mxu0 0.0
        %957 = vmatpush1.msra.mxu0 0.0
        %958 = vmatprep.subr.mxu0 0.0
        %959 = vmatpush1.msra.mxu0 0.0
        %960 = vmatprep.subr.mxu0 0.0
        %961 = vmatpush1.msra.mxu0 0.0
        %962 = vmatprep.subr.mxu0 0.0
        %963 = vmatpush1.msra.mxu0 0.0
        %964 = vmatprep.subr.mxu0 0.0
        %965 = vmatpush1.msra.mxu0 0.0
        %966 = vmatprep.subr.mxu0 0.0
        %967 = vmatpush1.msra.mxu0 0.0
        %968 = vmatprep.subr.mxu0 0.0
        %969 = vmatpush1.msra.mxu0 0.0
        %970 = vmatprep.subr.mxu0 0.0
        %971 = vmatpush1.msra.mxu0 0.0
        %972 = vmatprep.subr.mxu0 0.0
        %973 = vmatpush1.msra.mxu0 0.0
        %974 = vmatprep.subr.mxu0 0.0
        %975 = vmatpush1.msra.mxu0 0.0
        %976 = vmatprep.subr.mxu0 0.0
        %977 = vmatpush1.msra.mxu0 0.0
        %978 = vmatprep.subr.mxu0 0.0
        %979 = vmatpush1.msra.mxu0 0.0
        %980 = vmatprep.subr.mxu0 0.0
        %981 = vmatpush1.msra.mxu0 0.0
        %982 = vmatprep.subr.mxu0 0.0
        %983 = vmatpush1.msra.mxu0 0.0
        %984 = vmatprep.subr.mxu0 0.0
        %985 = vmatpush1.msra.mxu0 0.0
        %986 = vmatprep.subr.mxu0 0.0
        %987 = vmatpush1.msra.mxu0 0.0
        %988 = vmatprep.subr.mxu0 0.0
        %989 = vmatpush1.msra.mxu0 0.0
        %990 = vmatprep.subr.mxu0 0.0
        %991 = vmatpush1.msra.mxu0 0.0
        %992 = vmatprep.subr.mxu0 0.0
        %993 = vmatpush1.msra.mxu0 0.0
        %994 = vmatprep.subr.mxu0 0.0
        %995 = vmatpush1.msra.mxu0 0.0
        %996 = vmatprep.subr.mxu0 0.0
        %997 = vmatpush1.msra.mxu0 0.0
        %998 = vmatprep.subr.mxu0 0.0
        %999 = vmatpush1.msra.mxu0 0.0
        %1000 = vmatprep.subr.mxu0 0.0
        %1001 = vmatpush1.msra.mxu0 0.0
        %1002 = vmatprep.mubr.f32.mxu0 0.0
        %1003 = vmatmul.mubr.f32.gmra.mrb[0].mxu0 %v936
        %v1004 = vpop.f32.mrb[0].mxu0
        %v1005 = vadd.f32 0.0, %v1004
        %v1006 = vpop.f32.mrb[0].mxu0
        %1007 = vdwg.mxu0
        %1008 = vrot.lane.b32.xlu0 %v673, 120
        %v1009 = vpop.permute.xlu0 %1008
        %1010 = vrot.lane.b32.xlu0 %v754, 120
        %v1011 = vpop.permute.xlu0 %1010
        %v1012 = vsel %vm845, %v1009, 0
        %v1014 = vsel %vm845, %v1011, 0
        %1016 = vmatprep.subr.mxu0 0.0
        %1017 = vmatpush1.xpose.msra.mxu0 %v1014
        %1018 = vmatprep.subr.mxu0 0.0
        %1019 = vmatpush1.xpose.msra.mxu0 0.0
        %1020 = vmatprep.subr.mxu0 0.0
        %1021 = vmatpush1.xpose.msra.mxu0 0.0
        %1022 = vmatprep.subr.mxu0 0.0
        %1023 = vmatpush1.xpose.msra.mxu0 0.0
        %1024 = vmatprep.subr.mxu0 0.0
        %1025 = vmatpush1.xpose.msra.mxu0 0.0
        %1026 = vmatprep.subr.mxu0 0.0
        %1027 = vmatpush1.xpose.msra.mxu0 0.0
        %1028 = vmatprep.subr.mxu0 0.0
        %1029 = vmatpush1.xpose.msra.mxu0 0.0
        %1030 = vmatprep.subr.mxu0 0.0
        %1031 = vmatpush1.xpose.msra.mxu0 0.0
        %1032 = vmatprep.subr.mxu0 0.0
        %1033 = vmatpush1.xpose.msra.mxu0 0.0
        %1034 = vmatprep.subr.mxu0 0.0
        %1035 = vmatpush1.xpose.msra.mxu0 0.0
        %1036 = vmatprep.subr.mxu0 0.0
        %1037 = vmatpush1.xpose.msra.mxu0 0.0
        %1038 = vmatprep.subr.mxu0 0.0
        %1039 = vmatpush1.xpose.msra.mxu0 0.0
        %1040 = vmatprep.subr.mxu0 0.0
        %1041 = vmatpush1.xpose.msra.mxu0 0.0
        %1042 = vmatprep.subr.mxu0 0.0
        %1043 = vmatpush1.xpose.msra.mxu0 0.0
        %1044 = vmatprep.subr.mxu0 0.0
        %1045 = vmatpush1.xpose.msra.mxu0 0.0
        %1046 = vmatprep.subr.mxu0 0.0
        %1047 = vmatpush1.xpose.msra.mxu0 0.0
        %1048 = vmatprep.subr.mxu0 0.0
        %1049 = vmatpush1.xpose.msra.mxu0 0.0
        %1050 = vmatprep.subr.mxu0 0.0
        %1051 = vmatpush1.xpose.msra.mxu0 0.0
        %1052 = vmatprep.subr.mxu0 0.0
        %1053 = vmatpush1.xpose.msra.mxu0 0.0
        %1054 = vmatprep.subr.mxu0 0.0
        %1055 = vmatpush1.xpose.msra.mxu0 0.0
        %1056 = vmatprep.subr.mxu0 0.0
        %1057 = vmatpush1.xpose.msra.mxu0 0.0
        %1058 = vmatprep.subr.mxu0 0.0
        %1059 = vmatpush1.xpose.msra.mxu0 0.0
        %1060 = vmatprep.subr.mxu0 0.0
        %1061 = vmatpush1.xpose.msra.mxu0 0.0
        %1062 = vmatprep.subr.mxu0 0.0
        %1063 = vmatpush1.xpose.msra.mxu0 0.0
        %1064 = vmatprep.subr.mxu0 0.0
        %1065 = vmatpush1.xpose.msra.mxu0 0.0
        %1066 = vmatprep.subr.mxu0 0.0
        %1067 = vmatpush1.xpose.msra.mxu0 0.0
        %1068 = vmatprep.subr.mxu0 0.0
        %1069 = vmatpush1.xpose.msra.mxu0 0.0
        %1070 = vmatprep.subr.mxu0 0.0
        %1071 = vmatpush1.xpose.msra.mxu0 0.0
        %1072 = vmatprep.subr.mxu0 0.0
        %1073 = vmatpush1.xpose.msra.mxu0 0.0
        %1074 = vmatprep.subr.mxu0 0.0
        %1075 = vmatpush1.xpose.msra.mxu0 0.0
        %1076 = vmatprep.subr.mxu0 0.0
        %1077 = vmatpush1.xpose.msra.mxu0 0.0
        %1078 = vmatprep.subr.mxu0 0.0
        %1079 = vmatpush1.xpose.msra.mxu0 0.0
        %1080 = vmatprep.mubr.f32.mxu0 0.0
        %1081 = vmatmul.mubr.f32.gmra.mrb[0].mxu0 %v1012
        %v1082 = vpop.f32.mrb[0].mxu0
        %v1083 = vadd.f32 0.0, %v1082
        %v1084 = vpop.f32.mrb[0].mxu0
        %1085 = vdwg.mxu0
        %v1086 = vmul.f32 %v1083, 0.35355338
        %v1087 = vadd.f32 %v1086, %v587
        %v1088 = vsel %vm845, %v1087, -inf
        %1089 = vmax.xlane.f32.xlu0 %v1088
        %v1090 = vpop.xlane.xlu0 %1089
        %v1091 = vsub.f32 %v1087, %v1090
        %v1092 = vmul.f32 %v1091, 1.442695
        %v1093 = vpow.pop %v1092
        %v1094 = vsel %vm845, %v1093, 0.0
        %1095 = vadd.xlane.f32.xlu0 %v1094
        %v1096 = vpop.xlane.xlu0 %1095
        %v1097 = vrcp.pop %v1096
        %v1098 = vmul.f32 %v1093, %v1097
        %1100 = vrot.lane.b32.xlu0 %v838, 120
        %v1101 = vpop.permute.xlu0 %1100
        %v1104 = vsel %vm845, %v1098, 0
        %1106 = vmatprep.subr.mxu0 0.0
        %1107 = vmatpush1.msra.mxu0 %v1101
        %1108 = vmatprep.subr.mxu0 0.0
        %1109 = vmatpush1.msra.mxu0 0.0
        %1110 = vmatprep.subr.mxu0 0.0
        %1111 = vmatpush1.msra.mxu0 0.0
        %1112 = vmatprep.subr.mxu0 0.0
        %1113 = vmatpush1.msra.mxu0 0.0
        %1114 = vmatprep.subr.mxu0 0.0
        %1115 = vmatpush1.msra.mxu0 0.0
        %1116 = vmatprep.subr.mxu0 0.0
        %1117 = vmatpush1.msra.mxu0 0.0
        %1118 = vmatprep.subr.mxu0 0.0
        %1119 = vmatpush1.msra.mxu0 0.0
        %1120 = vmatprep.subr.mxu0 0.0
        %1121 = vmatpush1.msra.mxu0 0.0
        %1122 = vmatprep.subr.mxu0 0.0
        %1123 = vmatpush1.msra.mxu0 0.0
        %1124 = vmatprep.subr.mxu0 0.0
        %1125 = vmatpush1.msra.mxu0 0.0
        %1126 = vmatprep.subr.mxu0 0.0
        %1127 = vmatpush1.msra.mxu0 0.0
        %1128 = vmatprep.subr.mxu0 0.0
        %1129 = vmatpush1.msra.mxu0 0.0
        %1130 = vmatprep.subr.mxu0 0.0
        %1131 = vmatpush1.msra.mxu0 0.0
        %1132 = vmatprep.subr.mxu0 0.0
        %1133 = vmatpush1.msra.mxu0 0.0
        %1134 = vmatprep.subr.mxu0 0.0
        %1135 = vmatpush1.msra.mxu0 0.0
        %1136 = vmatprep.subr.mxu0 0.0
        %1137 = vmatpush1.msra.mxu0 0.0
        %1138 = vmatprep.subr.mxu0 0.0
        %1139 = vmatpush1.msra.mxu0 0.0
        %1140 = vmatprep.subr.mxu0 0.0
        %1141 = vmatpush1.msra.mxu0 0.0
        %1142 = vmatprep.subr.mxu0 0.0
        %1143 = vmatpush1.msra.mxu0 0.0
        %1144 = vmatprep.subr.mxu0 0.0
        %1145 = vmatpush1.msra.mxu0 0.0
        %1146 = vmatprep.subr.mxu0 0.0
        %1147 = vmatpush1.msra.mxu0 0.0
        %1148 = vmatprep.subr.mxu0 0.0
        %1149 = vmatpush1.msra.mxu0 0.0
        %1150 = vmatprep.subr.mxu0 0.0
        %1151 = vmatpush1.msra.mxu0 0.0
        %1152 = vmatprep.subr.mxu0 0.0
        %1153 = vmatpush1.msra.mxu0 0.0
        %1154 = vmatprep.subr.mxu0 0.0
        %1155 = vmatpush1.msra.mxu0 0.0
        %1156 = vmatprep.subr.mxu0 0.0
        %1157 = vmatpush1.msra.mxu0 0.0
        %1158 = vmatprep.subr.mxu0 0.0
        %1159 = vmatpush1.msra.mxu0 0.0
        %1160 = vmatprep.subr.mxu0 0.0
        %1161 = vmatpush1.msra.mxu0 0.0
        %1162 = vmatprep.subr.mxu0 0.0
        %1163 = vmatpush1.msra.mxu0 0.0
        %1164 = vmatprep.subr.mxu0 0.0
        %1165 = vmatpush1.msra.mxu0 0.0
        %1166 = vmatprep.subr.mxu0 0.0
        %1167 = vmatpush1.msra.mxu0 0.0
        %1168 = vmatprep.subr.mxu0 0.0
        %1169 = vmatpush1.msra.mxu0 0.0
        %1170 = vmatprep.mubr.f32.mxu0 0.0
        %1171 = vmatmul.mubr.f32.gmra.mrb[0].mxu0 %v1104
        %v1172 = vpop.f32.mrb[0].mxu0
        %v1173 = vadd.f32 0.0, %v1172
        %v1174 = vpop.f32.mrb[0].mxu0
        %1175 = vdwg.mxu0
        %v1177 = vsel %vm845, %v1173, 0
        %1179 = vmatprep.subr.mxu0 0.0
        %1180 = vmatpush1.msra.mxu0 %v842
        %1181 = vmatprep.subr.mxu0 0.0
        %1182 = vmatpush1.msra.mxu0 0.0
        %1183 = vmatprep.subr.mxu0 0.0
        %1184 = vmatpush1.msra.mxu0 0.0
        %1185 = vmatprep.subr.mxu0 0.0
        %1186 = vmatpush1.msra.mxu0 0.0
        %1187 = vmatprep.subr.mxu0 0.0
        %1188 = vmatpush1.msra.mxu0 0.0
        %1189 = vmatprep.subr.mxu0 0.0
        %1190 = vmatpush1.msra.mxu0 0.0
        %1191 = vmatprep.subr.mxu0 0.0
        %1192 = vmatpush1.msra.mxu0 0.0
        %1193 = vmatprep.subr.mxu0 0.0
        %1194 = vmatpush1.msra.mxu0 0.0
        %1195 = vmatprep.subr.mxu0 0.0
        %1196 = vmatpush1.msra.mxu0 0.0
        %1197 = vmatprep.subr.mxu0 0.0
        %1198 = vmatpush1.msra.mxu0 0.0
        %1199 = vmatprep.subr.mxu0 0.0
        %1200 = vmatpush1.msra.mxu0 0.0
        %1201 = vmatprep.subr.mxu0 0.0
        %1202 = vmatpush1.msra.mxu0 0.0
        %1203 = vmatprep.subr.mxu0 0.0
        %1204 = vmatpush1.msra.mxu0 0.0
        %1205 = vmatprep.subr.mxu0 0.0
        %1206 = vmatpush1.msra.mxu0 0.0
        %1207 = vmatprep.subr.mxu0 0.0
        %1208 = vmatpush1.msra.mxu0 0.0
        %1209 = vmatprep.subr.mxu0 0.0
        %1210 = vmatpush1.msra.mxu0 0.0
        %1211 = vmatprep.subr.mxu0 0.0
        %1212 = vmatpush1.msra.mxu0 0.0
        %1213 = vmatprep.subr.mxu0 0.0
        %1214 = vmatpush1.msra.mxu0 0.0
        %1215 = vmatprep.subr.mxu0 0.0
        %1216 = vmatpush1.msra.mxu0 0.0
        %1217 = vmatprep.subr.mxu0 0.0
        %1218 = vmatpush1.msra.mxu0 0.0
        %1219 = vmatprep.subr.mxu0 0.0
        %1220 = vmatpush1.msra.mxu0 0.0
        %1221 = vmatprep.subr.mxu0 0.0
        %1222 = vmatpush1.msra.mxu0 0.0
        %1223 = vmatprep.subr.mxu0 0.0
        %1224 = vmatpush1.msra.mxu0 0.0
        %1225 = vmatprep.subr.mxu0 0.0
        %1226 = vmatpush1.msra.mxu0 0.0
        %1227 = vmatprep.subr.mxu0 0.0
        %1228 = vmatpush1.msra.mxu0 0.0
        %1229 = vmatprep.subr.mxu0 0.0
        %1230 = vmatpush1.msra.mxu0 0.0
        %1231 = vmatprep.subr.mxu0 0.0
        %1232 = vmatpush1.msra.mxu0 0.0
        %1233 = vmatprep.subr.mxu0 0.0
        %1234 = vmatpush1.msra.mxu0 0.0
        %1235 = vmatprep.subr.mxu0 0.0
        %1236 = vmatpush1.msra.mxu0 0.0
        %1237 = vmatprep.subr.mxu0 0.0
        %1238 = vmatpush1.msra.mxu0 0.0
        %1239 = vmatprep.subr.mxu0 0.0
        %1240 = vmatpush1.msra.mxu0 0.0
        %1241 = vmatprep.subr.mxu0 0.0
        %1242 = vmatpush1.msra.mxu0 0.0
        %1243 = vmatprep.mubr.f32.mxu0 0.0
        %1244 = vmatmul.mubr.f32.gmra.mrb[0].mxu0 %v1177
        %v1245 = vpop.f32.mrb[0].mxu0
        %v1246 = vadd.f32 0.0, %v1245
        %v1247 = vpop.f32.mrb[0].mxu0
        %1248 = vdwg.mxu0
        %v1250 = vsel %vm845, %v1005, 0
        %1252 = vmatprep.subr.mxu0 0.0
        %1253 = vmatpush1.msra.mxu0 %v841
        %1254 = vmatprep.subr.mxu0 0.0
        %1255 = vmatpush1.msra.mxu0 0.0
        %1256 = vmatprep.subr.mxu0 0.0
        %1257 = vmatpush1.msra.mxu0 0.0
        %1258 = vmatprep.subr.mxu0 0.0
        %1259 = vmatpush1.msra.mxu0 0.0
        %1260 = vmatprep.subr.mxu0 0.0
        %1261 = vmatpush1.msra.mxu0 0.0
        %1262 = vmatprep.subr.mxu0 0.0
        %1263 = vmatpush1.msra.mxu0 0.0
        %1264 = vmatprep.subr.mxu0 0.0
        %1265 = vmatpush1.msra.mxu0 0.0
        %1266 = vmatprep.subr.mxu0 0.0
        %1267 = vmatpush1.msra.mxu0 0.0
        %1268 = vmatprep.subr.mxu0 0.0
        %1269 = vmatpush1.msra.mxu0 0.0
        %1270 = vmatprep.subr.mxu0 0.0
        %1271 = vmatpush1.msra.mxu0 0.0
        %1272 = vmatprep.subr.mxu0 0.0
        %1273 = vmatpush1.msra.mxu0 0.0
        %1274 = vmatprep.subr.mxu0 0.0
        %1275 = vmatpush1.msra.mxu0 0.0
        %1276 = vmatprep.subr.mxu0 0.0
        %1277 = vmatpush1.msra.mxu0 0.0
        %1278 = vmatprep.subr.mxu0 0.0
        %1279 = vmatpush1.msra.mxu0 0.0
        %1280 = vmatprep.subr.mxu0 0.0
        %1281 = vmatpush1.msra.mxu0 0.0
        %1282 = vmatprep.subr.mxu0 0.0
        %1283 = vmatpush1.msra.mxu0 0.0
        %1284 = vmatprep.subr.mxu0 0.0
        %1285 = vmatpush1.msra.mxu0 0.0
        %1286 = vmatprep.subr.mxu0 0.0
        %1287 = vmatpush1.msra.mxu0 0.0
        %1288 = vmatprep.subr.mxu0 0.0
        %1289 = vmatpush1.msra.mxu0 0.0
        %1290 = vmatprep.subr.mxu0 0.0
        %1291 = vmatpush1.msra.mxu0 0.0
        %1292 = vmatprep.subr.mxu0 0.0
        %1293 = vmatpush1.msra.mxu0 0.0
        %1294 = vmatprep.subr.mxu0 0.0
        %1295 = vmatpush1.msra.mxu0 0.0
        %1296 = vmatprep.subr.mxu0 0.0
        %1297 = vmatpush1.msra.mxu0 0.0
        %1298 = vmatprep.subr.mxu0 0.0
        %1299 = vmatpush1.msra.mxu0 0.0
        %1300 = vmatprep.subr.mxu0 0.0
        %1301 = vmatpush1.msra.mxu0 0.0
        %1302 = vmatprep.subr.mxu0 0.0
        %1303 = vmatpush1.msra.mxu0 0.0
        %1304 = vmatprep.subr.mxu0 0.0
        %1305 = vmatpush1.msra.mxu0 0.0
        %1306 = vmatprep.subr.mxu0 0.0
        %1307 = vmatpush1.msra.mxu0 0.0
        %1308 = vmatprep.subr.mxu0 0.0
        %1309 = vmatpush1.msra.mxu0 0.0
        %1310 = vmatprep.subr.mxu0 0.0
        %1311 = vmatpush1.msra.mxu0 0.0
        %1312 = vmatprep.subr.mxu0 0.0
        %1313 = vmatpush1.msra.mxu0 0.0
        %1314 = vmatprep.subr.mxu0 0.0
        %1315 = vmatpush1.msra.mxu0 0.0
        %1316 = vmatprep.mubr.f32.mxu0 0.0
        %1317 = vmatmul.mubr.f32.gmra.mrb[0].mxu0 %v1250
        %v1318 = vpop.f32.mrb[0].mxu0
        %v1319 = vadd.f32 %v1246, %v1318
        %v1320 = vpop.f32.mrb[0].mxu0
        %1321 = vdwg.mxu0
        %1322 = vrot.lane.b32.xlu0 %v673, 112
        %v1323 = vpop.permute.xlu0 %1322
        %1324 = vrot.lane.b32.xlu0 %v754, 112
        %v1325 = vpop.permute.xlu0 %1324
        %v1326 = vsel %vm845, %v1323, 0
        %v1328 = vsel %vm845, %v1325, 0
        %1330 = vmatprep.subr.mxu0 0.0
        %1331 = vmatpush1.xpose.msra.mxu0 %v1328
        %1332 = vmatprep.subr.mxu0 0.0
        %1333 = vmatpush1.xpose.msra.mxu0 0.0
        %1334 = vmatprep.subr.mxu0 0.0
        %1335 = vmatpush1.xpose.msra.mxu0 0.0
        %1336 = vmatprep.subr.mxu0 0.0
        %1337 = vmatpush1.xpose.msra.mxu0 0.0
        %1338 = vmatprep.subr.mxu0 0.0
        %1339 = vmatpush1.xpose.msra.mxu0 0.0
        %1340 = vmatprep.subr.mxu0 0.0
        %1341 = vmatpush1.xpose.msra.mxu0 0.0
        %1342 = vmatprep.subr.mxu0 0.0
        %1343 = vmatpush1.xpose.msra.mxu0 0.0
        %1344 = vmatprep.subr.mxu0 0.0
        %1345 = vmatpush1.xpose.msra.mxu0 0.0
        %1346 = vmatprep.subr.mxu0 0.0
        %1347 = vmatpush1.xpose.msra.mxu0 0.0
        %1348 = vmatprep.subr.mxu0 0.0
        %1349 = vmatpush1.xpose.msra.mxu0 0.0
        %1350 = vmatprep.subr.mxu0 0.0
        %1351 = vmatpush1.xpose.msra.mxu0 0.0
        %1352 = vmatprep.subr.mxu0 0.0
        %1353 = vmatpush1.xpose.msra.mxu0 0.0
        %1354 = vmatprep.subr.mxu0 0.0
        %1355 = vmatpush1.xpose.msra.mxu0 0.0
        %1356 = vmatprep.subr.mxu0 0.0
        %1357 = vmatpush1.xpose.msra.mxu0 0.0
        %1358 = vmatprep.subr.mxu0 0.0
        %1359 = vmatpush1.xpose.msra.mxu0 0.0
        %1360 = vmatprep.subr.mxu0 0.0
        %1361 = vmatpush1.xpose.msra.mxu0 0.0
        %1362 = vmatprep.subr.mxu0 0.0
        %1363 = vmatpush1.xpose.msra.mxu0 0.0
        %1364 = vmatprep.subr.mxu0 0.0
        %1365 = vmatpush1.xpose.msra.mxu0 0.0
        %1366 = vmatprep.subr.mxu0 0.0
        %1367 = vmatpush1.xpose.msra.mxu0 0.0
        %1368 = vmatprep.subr.mxu0 0.0
        %1369 = vmatpush1.xpose.msra.mxu0 0.0
        %1370 = vmatprep.subr.mxu0 0.0
        %1371 = vmatpush1.xpose.msra.mxu0 0.0
        %1372 = vmatprep.subr.mxu0 0.0
        %1373 = vmatpush1.xpose.msra.mxu0 0.0
        %1374 = vmatprep.subr.mxu0 0.0
        %1375 = vmatpush1.xpose.msra.mxu0 0.0
        %1376 = vmatprep.subr.mxu0 0.0
        %1377 = vmatpush1.xpose.msra.mxu0 0.0
        %1378 = vmatprep.subr.mxu0 0.0
        %1379 = vmatpush1.xpose.msra.mxu0 0.0
        %1380 = vmatprep.subr.mxu0 0.0
        %1381 = vmatpush1.xpose.msra.mxu0 0.0
        %1382 = vmatprep.subr.mxu0 0.0
        %1383 = vmatpush1.xpose.msra.mxu0 0.0
        %1384 = vmatprep.subr.mxu0 0.0
        %1385 = vmatpush1.xpose.msra.mxu0 0.0
        %1386 = vmatprep.subr.mxu0 0.0
        %1387 = vmatpush1.xpose.msra.mxu0 0.0
        %1388 = vmatprep.subr.mxu0 0.0
        %1389 = vmatpush1.xpose.msra.mxu0 0.0
        %1390 = vmatprep.subr.mxu0 0.0
        %1391 = vmatpush1.xpose.msra.mxu0 0.0
        %1392 = vmatprep.subr.mxu0 0.0
        %1393 = vmatpush1.xpose.msra.mxu0 0.0
        %1394 = vmatprep.mubr.f32.mxu0 0.0
        %1395 = vmatmul.mubr.f32.gmra.mrb[0].mxu0 %v1326
        %v1396 = vpop.f32.mrb[0].mxu0
        %v1397 = vadd.f32 0.0, %v1396
        %v1398 = vpop.f32.mrb[0].mxu0
        %1399 = vdwg.mxu0
        %v1400 = vmul.f32 %v1397, 0.35355338
        %v1401 = vadd.f32 %v1400, %v587
        %v1402 = vsel %vm845, %v1401, -inf
        %1403 = vmax.xlane.f32.xlu0 %v1402
        %v1404 = vpop.xlane.xlu0 %1403
        %v1405 = vsub.f32 %v1401, %v1404
        %v1406 = vmul.f32 %v1405, 1.442695
        %v1407 = vpow.pop %v1406
        %v1408 = vsel %vm845, %v1407, 0.0
        %1409 = vadd.xlane.f32.xlu0 %v1408
        %v1410 = vpop.xlane.xlu0 %1409
        %v1411 = vrcp.pop %v1410
        %v1412 = vmul.f32 %v1407, %v1411
        %1413 = vrot.lane.b32.xlu0 %v838, 112
        %v1414 = vpop.permute.xlu0 %1413
        %v1417 = vsel %vm845, %v1412, 0
        %1419 = vmatprep.subr.mxu0 0.0
        %1420 = vmatpush1.msra.mxu0 %v1414
        %1421 = vmatprep.subr.mxu0 0.0
        %1422 = vmatpush1.msra.mxu0 0.0
        %1423 = vmatprep.subr.mxu0 0.0
        %1424 = vmatpush1.msra.mxu0 0.0
        %1425 = vmatprep.subr.mxu0 0.0
        %1426 = vmatpush1.msra.mxu0 0.0
        %1427 = vmatprep.subr.mxu0 0.0
        %1428 = vmatpush1.msra.mxu0 0.0
        %1429 = vmatprep.subr.mxu0 0.0
        %1430 = vmatpush1.msra.mxu0 0.0
        %1431 = vmatprep.subr.mxu0 0.0
        %1432 = vmatpush1.msra.mxu0 0.0
        %1433 = vmatprep.subr.mxu0 0.0
        %1434 = vmatpush1.msra.mxu0 0.0
        %1435 = vmatprep.subr.mxu0 0.0
        %1436 = vmatpush1.msra.mxu0 0.0
        %1437 = vmatprep.subr.mxu0 0.0
        %1438 = vmatpush1.msra.mxu0 0.0
        %1439 = vmatprep.subr.mxu0 0.0
        %1440 = vmatpush1.msra.mxu0 0.0
        %1441 = vmatprep.subr.mxu0 0.0
        %1442 = vmatpush1.msra.mxu0 0.0
        %1443 = vmatprep.subr.mxu0 0.0
        %1444 = vmatpush1.msra.mxu0 0.0
        %1445 = vmatprep.subr.mxu0 0.0
        %1446 = vmatpush1.msra.mxu0 0.0
        %1447 = vmatprep.subr.mxu0 0.0
        %1448 = vmatpush1.msra.mxu0 0.0
        %1449 = vmatprep.subr.mxu0 0.0
        %1450 = vmatpush1.msra.mxu0 0.0
        %1451 = vmatprep.subr.mxu0 0.0
        %1452 = vmatpush1.msra.mxu0 0.0
        %1453 = vmatprep.subr.mxu0 0.0
        %1454 = vmatpush1.msra.mxu0 0.0
        %1455 = vmatprep.subr.mxu0 0.0
        %1456 = vmatpush1.msra.mxu0 0.0
        %1457 = vmatprep.subr.mxu0 0.0
        %1458 = vmatpush1.msra.mxu0 0.0
        %1459 = vmatprep.subr.mxu0 0.0
        %1460 = vmatpush1.msra.mxu0 0.0
        %1461 = vmatprep.subr.mxu0 0.0
        %1462 = vmatpush1.msra.mxu0 0.0
        %1463 = vmatprep.subr.mxu0 0.0
        %1464 = vmatpush1.msra.mxu0 0.0
        %1465 = vmatprep.subr.mxu0 0.0
        %1466 = vmatpush1.msra.mxu0 0.0
        %1467 = vmatprep.subr.mxu0 0.0
        %1468 = vmatpush1.msra.mxu0 0.0
        %1469 = vmatprep.subr.mxu0 0.0
        %1470 = vmatpush1.msra.mxu0 0.0
        %1471 = vmatprep.subr.mxu0 0.0
        %1472 = vmatpush1.msra.mxu0 0.0
        %1473 = vmatprep.subr.mxu0 0.0
        %1474 = vmatpush1.msra.mxu0 0.0
        %1475 = vmatprep.subr.mxu0 0.0
        %1476 = vmatpush1.msra.mxu0 0.0
        %1477 = vmatprep.subr.mxu0 0.0
        %1478 = vmatpush1.msra.mxu0 0.0
        %1479 = vmatprep.subr.mxu0 0.0
        %1480 = vmatpush1.msra.mxu0 0.0
        %1481 = vmatprep.subr.mxu0 0.0
        %1482 = vmatpush1.msra.mxu0 0.0
        %1483 = vmatprep.mubr.f32.mxu0 0.0
        %1484 = vmatmul.mubr.f32.gmra.mrb[0].mxu0 %v1417
        %v1485 = vpop.f32.mrb[0].mxu0
        %v1486 = vadd.f32 0.0, %v1485
        %v1487 = vpop.f32.mrb[0].mxu0
        %1488 = vdwg.mxu0
        %v1490 = vsel %vm845, %v1486, 0
        %1492 = vmatprep.subr.mxu0 0.0
        %1493 = vmatpush1.msra.mxu0 %v843
        %1494 = vmatprep.subr.mxu0 0.0
        %1495 = vmatpush1.msra.mxu0 0.0
        %1496 = vmatprep.subr.mxu0 0.0
        %1497 = vmatpush1.msra.mxu0 0.0
        %1498 = vmatprep.subr.mxu0 0.0
        %1499 = vmatpush1.msra.mxu0 0.0
        %1500 = vmatprep.subr.mxu0 0.0
        %1501 = vmatpush1.msra.mxu0 0.0
        %1502 = vmatprep.subr.mxu0 0.0
        %1503 = vmatpush1.msra.mxu0 0.0
        %1504 = vmatprep.subr.mxu0 0.0
        %1505 = vmatpush1.msra.mxu0 0.0
        %1506 = vmatprep.subr.mxu0 0.0
        %1507 = vmatpush1.msra.mxu0 0.0
        %1508 = vmatprep.subr.mxu0 0.0
        %1509 = vmatpush1.msra.mxu0 0.0
        %1510 = vmatprep.subr.mxu0 0.0
        %1511 = vmatpush1.msra.mxu0 0.0
        %1512 = vmatprep.subr.mxu0 0.0
        %1513 = vmatpush1.msra.mxu0 0.0
        %1514 = vmatprep.subr.mxu0 0.0
        %1515 = vmatpush1.msra.mxu0 0.0
        %1516 = vmatprep.subr.mxu0 0.0
        %1517 = vmatpush1.msra.mxu0 0.0
        %1518 = vmatprep.subr.mxu0 0.0
        %1519 = vmatpush1.msra.mxu0 0.0
        %1520 = vmatprep.subr.mxu0 0.0
        %1521 = vmatpush1.msra.mxu0 0.0
        %1522 = vmatprep.subr.mxu0 0.0
        %1523 = vmatpush1.msra.mxu0 0.0
        %1524 = vmatprep.subr.mxu0 0.0
        %1525 = vmatpush1.msra.mxu0 0.0
        %1526 = vmatprep.subr.mxu0 0.0
        %1527 = vmatpush1.msra.mxu0 0.0
        %1528 = vmatprep.subr.mxu0 0.0
        %1529 = vmatpush1.msra.mxu0 0.0
        %1530 = vmatprep.subr.mxu0 0.0
        %1531 = vmatpush1.msra.mxu0 0.0
        %1532 = vmatprep.subr.mxu0 0.0
        %1533 = vmatpush1.msra.mxu0 0.0
        %1534 = vmatprep.subr.mxu0 0.0
        %1535 = vmatpush1.msra.mxu0 0.0
        %1536 = vmatprep.subr.mxu0 0.0
        %1537 = vmatpush1.msra.mxu0 0.0
        %1538 = vmatprep.subr.mxu0 0.0
        %1539 = vmatpush1.msra.mxu0 0.0
        %1540 = vmatprep.subr.mxu0 0.0
        %1541 = vmatpush1.msra.mxu0 0.0
        %1542 = vmatprep.subr.mxu0 0.0
        %1543 = vmatpush1.msra.mxu0 0.0
        %1544 = vmatprep.subr.mxu0 0.0
        %1545 = vmatpush1.msra.mxu0 0.0
        %1546 = vmatprep.subr.mxu0 0.0
        %1547 = vmatpush1.msra.mxu0 0.0
        %1548 = vmatprep.subr.mxu0 0.0
        %1549 = vmatpush1.msra.mxu0 0.0
        %1550 = vmatprep.subr.mxu0 0.0
        %1551 = vmatpush1.msra.mxu0 0.0
        %1552 = vmatprep.subr.mxu0 0.0
        %1553 = vmatpush1.msra.mxu0 0.0
        %1554 = vmatprep.subr.mxu0 0.0
        %1555 = vmatpush1.msra.mxu0 0.0
        %1556 = vmatprep.mubr.f32.mxu0 0.0
        %1557 = vmatmul.mubr.f32.gmra.mrb[0].mxu0 %v1490
        %v1558 = vpop.f32.mrb[0].mxu0
        %v1559 = vadd.f32 0.0, %v1558
        %v1560 = vpop.f32.mrb[0].mxu0
        %1561 = vdwg.mxu0
        %v1562 = vadd.f32 %v1319, %v1559
        %1563 = vrot.lane.b32.xlu0 %v673, 104
        %v1564 = vpop.permute.xlu0 %1563
        %1565 = vrot.lane.b32.xlu0 %v754, 104
        %v1566 = vpop.permute.xlu0 %1565
        %v1567 = vsel %vm845, %v1564, 0
        %v1569 = vsel %vm845, %v1566, 0
        %1571 = vmatprep.subr.mxu0 0.0
        %1572 = vmatpush1.xpose.msra.mxu0 %v1569
        %1573 = vmatprep.subr.mxu0 0.0
        %1574 = vmatpush1.xpose.msra.mxu0 0.0
        %1575 = vmatprep.subr.mxu0 0.0
        %1576 = vmatpush1.xpose.msra.mxu0 0.0
        %1577 = vmatprep.subr.mxu0 0.0
        %1578 = vmatpush1.xpose.msra.mxu0 0.0
        %1579 = vmatprep.subr.mxu0 0.0
        %1580 = vmatpush1.xpose.msra.mxu0 0.0
        %1581 = vmatprep.subr.mxu0 0.0
        %1582 = vmatpush1.xpose.msra.mxu0 0.0
        %1583 = vmatprep.subr.mxu0 0.0
        %1584 = vmatpush1.xpose.msra.mxu0 0.0
        %1585 = vmatprep.subr.mxu0 0.0
        %1586 = vmatpush1.xpose.msra.mxu0 0.0
        %1587 = vmatprep.subr.mxu0 0.0
        %1588 = vmatpush1.xpose.msra.mxu0 0.0
        %1589 = vmatprep.subr.mxu0 0.0
        %1590 = vmatpush1.xpose.msra.mxu0 0.0
        %1591 = vmatprep.subr.mxu0 0.0
        %1592 = vmatpush1.xpose.msra.mxu0 0.0
        %1593 = vmatprep.subr.mxu0 0.0
        %1594 = vmatpush1.xpose.msra.mxu0 0.0
        %1595 = vmatprep.subr.mxu0 0.0
        %1596 = vmatpush1.xpose.msra.mxu0 0.0
        %1597 = vmatprep.subr.mxu0 0.0
        %1598 = vmatpush1.xpose.msra.mxu0 0.0
        %1599 = vmatprep.subr.mxu0 0.0
        %1600 = vmatpush1.xpose.msra.mxu0 0.0
        %1601 = vmatprep.subr.mxu0 0.0
        %1602 = vmatpush1.xpose.msra.mxu0 0.0
        %1603 = vmatprep.subr.mxu0 0.0
        %1604 = vmatpush1.xpose.msra.mxu0 0.0
        %1605 = vmatprep.subr.mxu0 0.0
        %1606 = vmatpush1.xpose.msra.mxu0 0.0
        %1607 = vmatprep.subr.mxu0 0.0
        %1608 = vmatpush1.xpose.msra.mxu0 0.0
        %1609 = vmatprep.subr.mxu0 0.0
        %1610 = vmatpush1.xpose.msra.mxu0 0.0
        %1611 = vmatprep.subr.mxu0 0.0
        %1612 = vmatpush1.xpose.msra.mxu0 0.0
        %1613 = vmatprep.subr.mxu0 0.0
        %1614 = vmatpush1.xpose.msra.mxu0 0.0
        %1615 = vmatprep.subr.mxu0 0.0
        %1616 = vmatpush1.xpose.msra.mxu0 0.0
        %1617 = vmatprep.subr.mxu0 0.0
        %1618 = vmatpush1.xpose.msra.mxu0 0.0
        %1619 = vmatprep.subr.mxu0 0.0
        %1620 = vmatpush1.xpose.msra.mxu0 0.0
        %1621 = vmatprep.subr.mxu0 0.0
        %1622 = vmatpush1.xpose.msra.mxu0 0.0
        %1623 = vmatprep.subr.mxu0 0.0
        %1624 = vmatpush1.xpose.msra.mxu0 0.0
        %1625 = vmatprep.subr.mxu0 0.0
        %1626 = vmatpush1.xpose.msra.mxu0 0.0
        %1627 = vmatprep.subr.mxu0 0.0
        %1628 = vmatpush1.xpose.msra.mxu0 0.0
        %1629 = vmatprep.subr.mxu0 0.0
        %1630 = vmatpush1.xpose.msra.mxu0 0.0
        %1631 = vmatprep.subr.mxu0 0.0
        %1632 = vmatpush1.xpose.msra.mxu0 0.0
        %1633 = vmatprep.subr.mxu0 0.0
        %1634 = vmatpush1.xpose.msra.mxu0 0.0
        %1635 = vmatprep.mubr.f32.mxu0 0.0
        %1636 = vmatmul.mubr.f32.gmra.mrb[0].mxu0 %v1567
        %v1637 = vpop.f32.mrb[0].mxu0
        %v1638 = vadd.f32 0.0, %v1637
        %v1639 = vpop.f32.mrb[0].mxu0
        %1640 = vdwg.mxu0
        %v1641 = vmul.f32 %v1638, 0.35355338
        %v1642 = vadd.f32 %v1641, %v587
        %v1643 = vsel %vm845, %v1642, -inf
        %1644 = vmax.xlane.f32.xlu0 %v1643
        %v1645 = vpop.xlane.xlu0 %1644
        %v1646 = vsub.f32 %v1642, %v1645
        %v1647 = vmul.f32 %v1646, 1.442695
        %v1648 = vpow.pop %v1647
        %v1649 = vsel %vm845, %v1648, 0.0
        %1650 = vadd.xlane.f32.xlu0 %v1649
        %v1651 = vpop.xlane.xlu0 %1650
        %v1652 = vrcp.pop %v1651
        %v1653 = vmul.f32 %v1648, %v1652
        %1654 = vrot.lane.b32.xlu0 %v838, 104
        %v1655 = vpop.permute.xlu0 %1654
        %v1658 = vsel %vm845, %v1653, 0
        %1660 = vmatprep.subr.mxu0 0.0
        %1661 = vmatpush1.msra.mxu0 %v1655
        %1662 = vmatprep.subr.mxu0 0.0
        %1663 = vmatpush1.msra.mxu0 0.0
        %1664 = vmatprep.subr.mxu0 0.0
        %1665 = vmatpush1.msra.mxu0 0.0
        %1666 = vmatprep.subr.mxu0 0.0
        %1667 = vmatpush1.msra.mxu0 0.0
        %1668 = vmatprep.subr.mxu0 0.0
        %1669 = vmatpush1.msra.mxu0 0.0
        %1670 = vmatprep.subr.mxu0 0.0
        %1671 = vmatpush1.msra.mxu0 0.0
        %1672 = vmatprep.subr.mxu0 0.0
        %1673 = vmatpush1.msra.mxu0 0.0
        %1674 = vmatprep.subr.mxu0 0.0
        %1675 = vmatpush1.msra.mxu0 0.0
        %1676 = vmatprep.subr.mxu0 0.0
        %1677 = vmatpush1.msra.mxu0 0.0
        %1678 = vmatprep.subr.mxu0 0.0
        %1679 = vmatpush1.msra.mxu0 0.0
        %1680 = vmatprep.subr.mxu0 0.0
        %1681 = vmatpush1.msra.mxu0 0.0
        %1682 = vmatprep.subr.mxu0 0.0
        %1683 = vmatpush1.msra.mxu0 0.0
        %1684 = vmatprep.subr.mxu0 0.0
        %1685 = vmatpush1.msra.mxu0 0.0
        %1686 = vmatprep.subr.mxu0 0.0
        %1687 = vmatpush1.msra.mxu0 0.0
        %1688 = vmatprep.subr.mxu0 0.0
        %1689 = vmatpush1.msra.mxu0 0.0
        %1690 = vmatprep.subr.mxu0 0.0
        %1691 = vmatpush1.msra.mxu0 0.0
        %1692 = vmatprep.subr.mxu0 0.0
        %1693 = vmatpush1.msra.mxu0 0.0
        %1694 = vmatprep.subr.mxu0 0.0
        %1695 = vmatpush1.msra.mxu0 0.0
        %1696 = vmatprep.subr.mxu0 0.0
        %1697 = vmatpush1.msra.mxu0 0.0
        %1698 = vmatprep.subr.mxu0 0.0
        %1699 = vmatpush1.msra.mxu0 0.0
        %1700 = vmatprep.subr.mxu0 0.0
        %1701 = vmatpush1.msra.mxu0 0.0
        %1702 = vmatprep.subr.mxu0 0.0
        %1703 = vmatpush1.msra.mxu0 0.0
        %1704 = vmatprep.subr.mxu0 0.0
        %1705 = vmatpush1.msra.mxu0 0.0
        %1706 = vmatprep.subr.mxu0 0.0
        %1707 = vmatpush1.msra.mxu0 0.0
        %1708 = vmatprep.subr.mxu0 0.0
        %1709 = vmatpush1.msra.mxu0 0.0
        %1710 = vmatprep.subr.mxu0 0.0
        %1711 = vmatpush1.msra.mxu0 0.0
        %1712 = vmatprep.subr.mxu0 0.0
        %1713 = vmatpush1.msra.mxu0 0.0
        %1714 = vmatprep.subr.mxu0 0.0
        %1715 = vmatpush1.msra.mxu0 0.0
        %1716 = vmatprep.subr.mxu0 0.0
        %1717 = vmatpush1.msra.mxu0 0.0
        %1718 = vmatprep.subr.mxu0 0.0
        %1719 = vmatpush1.msra.mxu0 0.0
        %1720 = vmatprep.subr.mxu0 0.0
        %1721 = vmatpush1.msra.mxu0 0.0
        %1722 = vmatprep.subr.mxu0 0.0
        %1723 = vmatpush1.msra.mxu0 0.0
        %1724 = vmatprep.mubr.f32.mxu0 0.0
        %1725 = vmatmul.mubr.f32.gmra.mrb[0].mxu0 %v1658
        %v1726 = vpop.f32.mrb[0].mxu0
        %v1727 = vadd.f32 0.0, %v1726
        %v1728 = vpop.f32.mrb[0].mxu0
        %1729 = vdwg.mxu0
        %v1731 = vsel %vm845, %v1727, 0
        %1733 = vmatprep.subr.mxu0 0.0
        %1734 = vmatpush1.msra.mxu0 %v844
        %1735 = vmatprep.subr.mxu0 0.0
        %1736 = vmatpush1.msra.mxu0 0.0
        %1737 = vmatprep.subr.mxu0 0.0
        %1738 = vmatpush1.msra.mxu0 0.0
        %1739 = vmatprep.subr.mxu0 0.0
        %1740 = vmatpush1.msra.mxu0 0.0
        %1741 = vmatprep.subr.mxu0 0.0
        %1742 = vmatpush1.msra.mxu0 0.0
        %1743 = vmatprep.subr.mxu0 0.0
        %1744 = vmatpush1.msra.mxu0 0.0
        %1745 = vmatprep.subr.mxu0 0.0
        %1746 = vmatpush1.msra.mxu0 0.0
        %1747 = vmatprep.subr.mxu0 0.0
        %1748 = vmatpush1.msra.mxu0 0.0
        %1749 = vmatprep.subr.mxu0 0.0
        %1750 = vmatpush1.msra.mxu0 0.0
        %1751 = vmatprep.subr.mxu0 0.0
        %1752 = vmatpush1.msra.mxu0 0.0
        %1753 = vmatprep.subr.mxu0 0.0
        %1754 = vmatpush1.msra.mxu0 0.0
        %1755 = vmatprep.subr.mxu0 0.0
        %1756 = vmatpush1.msra.mxu0 0.0
        %1757 = vmatprep.subr.mxu0 0.0
        %1758 = vmatpush1.msra.mxu0 0.0
        %1759 = vmatprep.subr.mxu0 0.0
        %1760 = vmatpush1.msra.mxu0 0.0
        %1761 = vmatprep.subr.mxu0 0.0
        %1762 = vmatpush1.msra.mxu0 0.0
        %1763 = vmatprep.subr.mxu0 0.0
        %1764 = vmatpush1.msra.mxu0 0.0
        %1765 = vmatprep.subr.mxu0 0.0
        %1766 = vmatpush1.msra.mxu0 0.0
        %1767 = vmatprep.subr.mxu0 0.0
        %1768 = vmatpush1.msra.mxu0 0.0
        %1769 = vmatprep.subr.mxu0 0.0
        %1770 = vmatpush1.msra.mxu0 0.0
        %1771 = vmatprep.subr.mxu0 0.0
        %1772 = vmatpush1.msra.mxu0 0.0
        %1773 = vmatprep.subr.mxu0 0.0
        %1774 = vmatpush1.msra.mxu0 0.0
        %1775 = vmatprep.subr.mxu0 0.0
        %1776 = vmatpush1.msra.mxu0 0.0
        %1777 = vmatprep.subr.mxu0 0.0
        %1778 = vmatpush1.msra.mxu0 0.0
        %1779 = vmatprep.subr.mxu0 0.0
        %1780 = vmatpush1.msra.mxu0 0.0
        %1781 = vmatprep.subr.mxu0 0.0
        %1782 = vmatpush1.msra.mxu0 0.0
        %1783 = vmatprep.subr.mxu0 0.0
        %1784 = vmatpush1.msra.mxu0 0.0
        %1785 = vmatprep.subr.mxu0 0.0
        %1786 = vmatpush1.msra.mxu0 0.0
        %1787 = vmatprep.subr.mxu0 0.0
        %1788 = vmatpush1.msra.mxu0 0.0
        %1789 = vmatprep.subr.mxu0 0.0
        %1790 = vmatpush1.msra.mxu0 0.0
        %1791 = vmatprep.subr.mxu0 0.0
        %1792 = vmatpush1.msra.mxu0 0.0
        %1793 = vmatprep.subr.mxu0 0.0
        %1794 = vmatpush1.msra.mxu0 0.0
        %1795 = vmatprep.subr.mxu0 0.0
        %1796 = vmatpush1.msra.mxu0 0.0
        %1797 = vmatprep.mubr.f32.mxu0 0.0
        %1798 = vmatmul.mubr.f32.gmra.mrb[0].mxu0 %v1731
        %v1799 = vpop.f32.mrb[0].mxu0
        %v1800 = vadd.f32 0.0, %v1799
        %v1801 = vpop.f32.mrb[0].mxu0
        %1802 = vdwg.mxu0
        %v1803 = vadd.f32 %v1562, %v1800
        %v1804 = vld [vmem:[%s10] sm:$0x1]
        %v1806 = vlaneseq
        %v1807 = vshrl.u32 %v1806, 7
        %v1808 = vsub.s32 0, %v1807
        %v1809 = vrot.slane %v1804, %v1808
        %v1811 = vadd.f32 %v1803, %v1809
        %v1812 = vadd.f32 %v585, %v1811
        %v1813 = vsel %vm602, %v1812, 0.0
        %1814 = vadd.xlane.f32.xlu0 %v1813
        %v1815 = vpop.xlane.xlu0 %1814
        %v1816 = vrcp.pop 32.0
        %v1817 = vmul.f32 %v1815, %v1816
        %v1818 = vsub.f32 %v1812, %v1817
        %v1819 = vmul.f32 %v1818, %v1818
        %v1820 = vsel %vm602, %v1819, 0.0
        %1821 = vadd.xlane.f32.xlu0 %v1820
        %v1822 = vpop.xlane.xlu0 %1821
        %v1823 = vmul.f32 %v1822, %v1816
        %v1824 = vadd.f32 %v1823, 1e-05
        %v1825 = vrsqrt.pop %v1824
        %v1826 = vmul.f32 %v1818, %v1825
        %v1828 = vlaneseq
        %v1829 = vshrl.u32 %v1828, 7
        %v1830 = vsub.s32 0, %v1829
        %v1831 = vrot.slane %v588, %v1830
        %v1833 = vmul.f32 %v1826, %v1831
        %v1835 = vlaneseq
        %v1836 = vshrl.u32 %v1835, 7
        %v1837 = vsub.s32 0, %v1836
        %v1838 = vrot.slane %v589, %v1837
        %v1840 = vadd.f32 %v1833, %v1838
        %1841 = vst.msk [vmem:[%s584] sm:$0xff] %vm602, %v1840
        %s1842 = sand.u32 %s331, 1
        %s1843 = scalar_lea.sflag [#allocation4], %s1842
        %s1844 = sand.u32 %s331, 1
        %s1845 = smul.addr %s1844, 8
        %s1846 = scalar_lea.vmem [#allocation14], %s1845
        // Predicated region
        $region101: #{tpu_custom_call.1} parent=71 // pred_check
          %p1847 = pneg %p341
        $region102: #{tpu_custom_call.1} parent=71 // pred_check_branch
          %1849 = sbr.rel (%p1847) target = $region104
        $region103: #{tpu_custom_call.1} parent=71 // pred_region
          %s1851 = ssub.s32 128, 128
          %1852 = vsyncadd %s1843, %s1851
          %s1853 = smul.addr %s35, 128
          %s1854 = scalar_lea.hbm %s13, %s1853
          %s1856 = sshll.u32 %s1846, 4
          %s1857 = int_to_ptr.vmem [resolvable:$true] %s1856
          %1859 = dma.vmem_to_hbm [thread:$0]  %s1857, 128, %s1854, %s1843
        $region104: #{tpu_custom_call.1} parent=71 // pred_fallthru
          _
      $region72: #{tpu_custom_call.1} parent=5 // pred_fallthru
        _
      %p1860 = scmp.le.s32.totalorder 2, %s30
      // Predicated region
      $region105: #{tpu_custom_call.1} parent=5 // pred_check
        %p1861 = pneg %p1860
      $region106: #{tpu_custom_call.1} parent=5 // pred_check_branch
        %1863 = sbr.rel (%p1861) target = $region108
      $region107: #{tpu_custom_call.1} parent=5 // pred_region
        %s1864 = ssub.s32 %s30, 2
        // Predicated region
        $region109: #{tpu_custom_call.1} parent=107 // pred_check
          %p1865 = pneg %p347
        $region110: #{tpu_custom_call.1} parent=107 // pred_check_branch
          %1867 = sbr.rel (%p1865) target = $region112
        $region111: #{tpu_custom_call.1} parent=107 // pred_region
          %s1868 = sand.u32 %s332, 1
          %s1869 = scalar_lea.sflag [#allocation4], %s1868
          %s1870 = sand.u32 %s332, 1
          %s1871 = smul.addr %s1870, 8
          %s1872 = scalar_lea.vmem [#allocation14], %s1871
          %1873 = dma.done %s1869, 128
        $region112: #{tpu_custom_call.1} parent=107 // pred_fallthru
          _
      $region108: #{tpu_custom_call.1} parent=5 // pred_fallthru
        _
    $region6: #{tpu_custom_call.1} parent=1 // loop_footer
      %s34 = sadd.s32 1, %s30
    $region7: #{tpu_custom_call.1} parent=1 // loop_footer_branch
      %29 = sbr.rel target = $region3
    $region8: #{tpu_custom_call.1} parent=1 // loop_exit
      _
    %1874 = vsyncpa [#allocation3], 1
    %s1875 = scalar_lea.sflag [#allocation3], 1
    %1876 = vsyncpa %s1875, 1
    %1877 = vsyncpa [#allocation6], 1
    %s1878 = scalar_lea.sflag [#allocation6], 1
    %1879 = vsyncpa %s1878, 1
    %1880 = vsyncpa [#allocation9], 1
    %1881 = vsyncpa [#allocation12], 1
    %1882 = vsyncpa [#allocation4], 1
    %s1883 = scalar_lea.sflag [#allocation4], 1
    %1884 = vsyncpa %s1883, 1

</llo_original>
